<compile_context>
chip_gen: v7x
topology: tpu7x:2x2x1
jax: 0.10.0
libtpu: 0.0.40
codegen_flags: <defaults>
</compile_context>

<pallas_src>
import jax
import jax.numpy as jnp
from jax.experimental import pallas as pl
from jax.experimental.pallas import tpu as pltpu


def _leaky(x):
    return jnp.where(x > 0, x, 0.01 * x)          # nn.LeakyReLU default slope


def _bf16(x):
    return x.astype(jnp.bfloat16)


# ---------------------------------------------------------------------------
# Phase 1 kernel: projections + concat + shared MLP (row tile of nodes).
# ---------------------------------------------------------------------------
def _proj_kernel(screen_ref, des_ref, tweet_ref, small_ref,
                 w_text_ref, w_small_ref, b_proj_ref, w_lin_ref, b_lin_ref,
                 out_ref):
    # 768->16 text projections: f32 tiles cast to bf16 in-register, f32 acc.
    s = jnp.dot(_bf16(screen_ref[...]), w_text_ref[0],
                preferred_element_type=jnp.float32)
    d = jnp.dot(_bf16(des_ref[...]), w_text_ref[1],
                preferred_element_type=jnp.float32)
    t = jnp.dot(_bf16(tweet_ref[...]), w_text_ref[2],
                preferred_element_type=jnp.float32)
    # profile||personal (tm,12) through a block-diagonal (12,16) weight gives
    # both 8-wide projections in one matmul.
    sm = jnp.dot(_bf16(small_ref[...]), w_small_ref[...],
                 preferred_element_type=jnp.float32)
    x1 = _leaky(jnp.concatenate([s, d, t, sm], axis=1) + b_proj_ref[...])
    x0 = _leaky(jnp.dot(_bf16(x1), w_lin_ref[...],
                        preferred_element_type=jnp.float32) + b_lin_ref[...])
    # Single lane-dense (tm,128) store: x1 in lanes 0-63, x0 in lanes 64-127.
    out_ref[...] = jnp.concatenate([x1, x0], axis=1)


# ---------------------------------------------------------------------------
# Phase 2 (resident variant): 3x GCN (+ x1 residual) + head, adj VMEM-resident.
# ---------------------------------------------------------------------------
def _gcn_head_resident_kernel(adj_ref, packed_ref, w_gcn_ref, b_gcn_ref,
                              w_o1_ref, b_o1_ref, w_o2_ref, b_o2_ref, out_ref):
    adj = adj_ref[...]                      # (n, n) bf16
    x1 = packed_ref[:, 0:64]                # f32 residual
    x = packed_ref[:, 64:128]               # f32 running features
    for k in range(3):                      # GCNConv: A_hat @ (X W) + b, + x1
        xw = jnp.dot(_bf16(x), w_gcn_ref[k], preferred_element_type=jnp.float32)
        x = (jnp.dot(adj, _bf16(xw), preferred_element_type=jnp.float32)
             + b_gcn_ref[k] + x1)
    x = _leaky(jnp.dot(_bf16(x), w_o1_ref[...],
                       preferred_element_type=jnp.float32) + b_o1_ref[...])
    logits = (jnp.dot(_bf16(x), w_o2_ref[...],
                      preferred_element_type=jnp.float32) + b_o2_ref[...])
    out_ref[...] = jax.nn.sigmoid(logits)


# ---------------------------------------------------------------------------
# Phase 2 (streamed variant): per-layer row-tiled GCN, (A_tile @ X) @ W.
# ---------------------------------------------------------------------------
def _gcn_layer_kernel(adj_ref, x_ref, x1_ref, w_ref, b_ref, out_ref):
    ax = jnp.dot(adj_ref[...], x_ref[...], preferred_element_type=jnp.float32)
    y = jnp.dot(_bf16(ax), w_ref[...], preferred_element_type=jnp.float32)
    out_ref[...] = (y + b_ref[...] + x1_ref[...]).astype(out_ref.dtype)


def _gcn_head_tile_kernel(adj_ref, x_ref, x1_ref, w_ref, b_ref,
                          w_o1_ref, b_o1_ref, w_o2_ref, b_o2_ref, out_ref):
    ax = jnp.dot(adj_ref[...], x_ref[...], preferred_element_type=jnp.float32)
    x3 = (jnp.dot(_bf16(ax), w_ref[...], preferred_element_type=jnp.float32)
          + b_ref[...] + x1_ref[...])
    x4 = _leaky(jnp.dot(_bf16(x3), w_o1_ref[...],
                        preferred_element_type=jnp.float32) + b_o1_ref[...])
    logits = (jnp.dot(_bf16(x4), w_o2_ref[...],
                      preferred_element_type=jnp.float32) + b_o2_ref[...])
    out_ref[...] = jax.nn.sigmoid(logits)


# ---------------------------------------------------------------------------
# Wrapper: operand packing, padding, BlockSpecs, generation-aware VMEM sizing.
# ---------------------------------------------------------------------------
def _vmem_cap_bytes():
    # Generation-aware physical VMEM (128 MiB on v5e/v6e, 64 MiB per TC on v7x).
    try:
        return int(pltpu.get_tpu_info().vmem_capacity_bytes)
    except Exception:
        return 64 << 20                       # safe floor (v7x)


def _vmem_limit(active_bytes, cap):
    # request what we use + a little slack; leave ~12 MiB for Mosaic internals.
    return int(min(max(active_bytes + (4 << 20), 16 << 20), cap - (12 << 20)))


def pack_params(params):
    """Pack the 22 per-layer tensors into a few (mostly bf16) operands."""
    (ws, bs, wd, bd, wt, bt, wp, bp, wpe, bpe,
     wl, bl, wg1, bg1, wg2, bg2, wg3, bg3, wo1, bo1, wo2, bo2) = params
    w_text = jnp.stack([ws, wd, wt]).astype(jnp.bfloat16)          # (3,768,16)
    w_small = jnp.zeros((12, 16), jnp.float32)
    w_small = w_small.at[0:5, 0:8].set(wp).at[5:12, 8:16].set(wpe)  # block-diag
    b_proj = jnp.concatenate([bs, bd, bt, bp, bpe], axis=1)        # (1,64)
    return dict(
        w_text=w_text,
        w_small=w_small.astype(jnp.bfloat16),
        b_proj=b_proj,
        w_lin=wl.astype(jnp.bfloat16), b_lin=bl,
        w_gcn=jnp.stack([wg1, wg2, wg3]).astype(jnp.bfloat16),     # (3,64,64)
        b_gcn=jnp.stack([bg1, bg2, bg3]),                          # (3,1,64)
        w_o1=wo1.astype(jnp.bfloat16), b_o1=bo1,
        w_o2=wo2.astype(jnp.bfloat16), b_o2=bo2)


def _phase2_streamed(adj_bf, packed, p, n_pad, cap):
    x1 = packed[:, :64]                              # f32 residual
    x = packed[:, 64:].astype(jnp.bfloat16)          # bf16 running features

    tm = n_pad if n_pad <= 512 else 512
    if n_pad > 512:
        # shrink the adj stripe if double-buffering it would blow VMEM
        while tm > 64 and (2 * tm * n_pad * 2 + 2 * n_pad * 64 * 2
                           > int(0.6 * (cap - (12 << 20)))):
            tm //= 2
    grid = (n_pad // tm,)

    adj_spec = pl.BlockSpec((tm, n_pad), lambda i: (i, 0))    # bf16 row stripe
    x_spec = pl.BlockSpec((n_pad, 64), lambda i: (0, 0))      # resident X
    x1_spec = pl.BlockSpec((tm, 64), lambda i: (i, 0))        # residual tile
    w_spec = pl.BlockSpec((64, 64), lambda i: (0, 0))
    b_spec = pl.BlockSpec((1, 64), lambda i: (0, 0))
    tile_bytes = (2 * tm * n_pad * 2 + 2 * n_pad * 64 * 2
                  + 4 * tm * 64 * 4)
    cparams = pltpu.CompilerParams(
        dimension_semantics=("parallel",),
        vmem_limit_bytes=_vmem_limit(tile_bytes, cap))

    # GCN layers 1-2: bf16 output feeds the next layer's contraction directly.
    for k in range(2):
        x = pl.pallas_call(
            _gcn_layer_kernel,
            grid=grid,
            out_shape=jax.ShapeDtypeStruct((n_pad, 64), jnp.bfloat16),
            in_specs=[adj_spec, x_spec, x1_spec, w_spec, b_spec],
            out_specs=pl.BlockSpec((tm, 64), lambda i: (i, 0)),
            compiler_params=cparams,
        )(adj_bf, x, x1, p["w_gcn"][k], p["b_gcn"][k])

    # GCN layer 3 fused with the (row-local) output head.
    return pl.pallas_call(
        _gcn_head_tile_kernel,
        grid=grid,
        out_shape=jax.ShapeDtypeStruct((n_pad, 2), jnp.float32),
        in_specs=[adj_spec, x_spec, x1_spec, w_spec, b_spec,
                  w_spec, b_spec,
                  pl.BlockSpec((64, 2), lambda i: (0, 0)),
                  pl.BlockSpec((1, 2), lambda i: (0, 0))],
        out_specs=pl.BlockSpec((tm, 2), lambda i: (i, 0)),
        compiler_params=cparams,
    )(adj_bf, x, x1, p["w_gcn"][2], p["b_gcn"][2],
      p["w_o1"], p["b_o1"], p["w_o2"], p["b_o2"])


def robot_graph_classify(adj, screen, des, tweet, profile, personal, params,
                         *, force_streamed=False):
    n = screen.shape[0]
    p = pack_params(params)
    cap = _vmem_cap_bytes()

    # ---- padding / tiling ---------------------------------------------------
    if n <= 512:
        tm, n_pad = n, n
    else:
        tm = 512
        n_pad = int(pl.cdiv(n, tm)) * tm

    def pad_rows(a):
        return a if a.shape[0] == n_pad else jnp.pad(a, ((0, n_pad - n), (0, 0)))

    screen, des, tweet = pad_rows(screen), pad_rows(des), pad_rows(tweet)
    small = pad_rows(jnp.concatenate([profile, personal], axis=1))
    # bf16 adjacency: halves HBM/VMEM bytes; f32 MXU accumulation keeps numerics.
    adj_bf = adj if adj.dtype == jnp.bfloat16 else adj.astype(jnp.bfloat16)
    if n_pad != n:
        adj_bf = jnp.pad(adj_bf, ((0, n_pad - n), (0, n_pad - n)))

    # ---- phase 1: projections + concat + shared MLP (row tiles) ------------
    def full(shape):
        return pl.BlockSpec(shape, lambda i, _s=shape: (0,) * len(_s))

    tile_bytes1 = 2 * (3 * tm * 768 * 4 + tm * 128 * 4 + tm * 128 * 4)
    packed = pl.pallas_call(
        _proj_kernel,
        grid=(n_pad // tm,),
        out_shape=jax.ShapeDtypeStruct((n_pad, 128), jnp.float32),
        in_specs=[
            pl.BlockSpec((tm, 768), lambda i: (i, 0)),   # screen (f32 streamed)
            pl.BlockSpec((tm, 768), lambda i: (i, 0)),   # des
            pl.BlockSpec((tm, 768), lambda i: (i, 0)),   # tweet
            pl.BlockSpec((tm, 12), lambda i: (i, 0)),    # profile||personal
            full((3, 768, 16)),                          # packed text weights
            full((12, 16)),                              # block-diag small W
            full((1, 64)),                               # packed proj biases
            full((64, 64)),                              # shared MLP weight
            full((1, 64)),                               # shared MLP bias
        ],
        out_specs=pl.BlockSpec((tm, 128), lambda i: (i, 0)),
        compiler_params=pltpu.CompilerParams(
            dimension_semantics=("parallel",),
            vmem_limit_bytes=_vmem_limit(tile_bytes1, cap)),
    )(screen, des, tweet, small, p["w_text"], p["w_small"], p["b_proj"],
      p["w_lin"], p["b_lin"])

    # ---- phase 2: GCN stack + head ------------------------------------------
    resident_bytes = (n_pad * n_pad * 2          # bf16 adjacency
                      + n_pad * 128 * 4          # packed x1|x0
                      + 4 * n_pad * 64 * 4       # f32 intermediates
                      + n_pad * 2 * 4            # output
                      + (1 << 20))               # weights + slack
    use_resident = (not force_streamed) and (
        resident_bytes + (8 << 20) <= cap - (12 << 20))

    if use_resident:
        vmem = pl.BlockSpec(memory_space=pltpu.MemorySpace.VMEM)
        out = pl.pallas_call(
            _gcn_head_resident_kernel,
            out_shape=jax.ShapeDtypeStruct((n_pad, 2), jnp.float32),
            in_specs=[vmem] * 8,
            out_specs=vmem,
            compiler_params=pltpu.CompilerParams(
                vmem_limit_bytes=_vmem_limit(resident_bytes, cap)),
        )(adj_bf, packed, p["w_gcn"], p["b_gcn"],
          p["w_o1"], p["b_o1"], p["w_o2"], p["b_o2"])
    else:
        out = _phase2_streamed(adj_bf, packed, p, n_pad, cap)

    return out[:n]


# ---------------------------------------------------------------------------
# Glue: dense symmetrically-normalized adjacency (GCNConv semantics) in JAX.
# ---------------------------------------------------------------------------
def build_norm_adj(edge_index, n):
    src, dst = edge_index[0], edge_index[1]
    a = jnp.zeros((n, n), jnp.float32).at[dst, src].add(1.0)
    a = a + jnp.eye(n, dtype=jnp.float32)          # add self-loops
    deg = a.sum(axis=1)
    dinv = jnp.where(deg > 0, 1.0 / jnp.sqrt(deg), 0.0)
    return dinv[:, None] * a * dinv[None, :]


def make_params(key):
    """Deterministic synthetic parameters. Linear weights stored as (in, out)."""
    dims = [
        (768, 16),  # screenFeature
        (768, 16),  # descriptionFeature
        (768, 16),  # textLinear
        (5, 8),     # proLinear
        (7, 8),     # personalLinear
        (64, 64),   # linear
        (64, 64),   # gcn1
        (64, 64),   # gcn2
        (64, 64),   # gcn3
        (64, 64),   # outLinear[0]
        (64, 2),    # outLinear[2]
    ]
    params = []
    keys = jax.random.split(key, len(dims))
    for k, (din, dout) in zip(keys, dims):
        kw, kb = jax.random.split(k)
        w = jax.random.normal(kw, (din, dout), jnp.float32) * (1.0 / jnp.sqrt(din))
        b = jax.random.normal(kb, (1, dout), jnp.float32) * 0.01
        params += [w, b]
    return params


def reference_forward(adj, screen, des, tweet, profile, personal, params):
    """Pure-JAX f32 reference (same math, no Pallas) for a correctness check."""
    (ws, bs, wd, bd, wt, bt, wp, bp, wpe, bpe,
     wl, bl, wg1, bg1, wg2, bg2, wg3, bg3, wo1, bo1, wo2, bo2) = params
    leaky = lambda x: jnp.where(x > 0, x, 0.01 * x)
    s = leaky(screen @ ws + bs)
    d = leaky(des @ wd + bd)
    t = leaky(tweet @ wt + bt)
    p = leaky(profile @ wp + bp)
    pe = leaky(personal @ wpe + bpe)
    x1 = jnp.concatenate([s, d, t, p, pe], axis=1)
    x = leaky(x1 @ wl + bl)
    x = adj @ (x @ wg1) + bg1 + x1
    x = adj @ (x @ wg2) + bg2 + x1
    x = adj @ (x @ wg3) + bg3 + x1
    x = leaky(x @ wo1 + bo1)
    return jax.nn.sigmoid(x @ wo2 + bo2)


if __name__ == "__main__":
    key = jax.random.PRNGKey(0)
    k_in, k_par = jax.random.split(key)
    params = make_params(k_par)

    def check(n, force_streamed):
        ks = jax.random.split(jax.random.fold_in(k_in, n), 5)
        screen = jax.random.normal(ks[0], (n, 768), jnp.float32)
        des = jax.random.normal(ks[1], (n, 768), jnp.float32)
        tweet = jax.random.normal(ks[2], (n, 768), jnp.float32)
        profile = jax.random.normal(ks[3], (n, 5), jnp.float32)
        personal = jax.random.normal(ks[4], (n, 7), jnp.float32)
        # deterministic ring graph, both directions: edge shape (2, 2N)
        idx = jnp.arange(n, dtype=jnp.int32)
        edge = jnp.concatenate(
            [jnp.stack([idx, (idx + 1) % n]), jnp.stack([(idx + 1) % n, idx])],
            axis=1)
        # edgeRelation is unused by the PyTorch forward -> not passed.
        adj = build_norm_adj(edge, n)
        out = robot_graph_classify(adj, screen, des, tweet, profile, personal,
                                   params, force_streamed=force_streamed)
        out = jax.block_until_ready(out)
        ref = reference_forward(adj, screen, des, tweet, profile, personal,
                                params)
        assert out.shape == (n, 2)
        err = float(jnp.max(jnp.abs(out - ref)))
        # bf16 operands everywhere (f32 accumulation) vs f32 reference.
        assert jnp.allclose(out, ref, atol=3e-2, rtol=3e-2), err

    check(16, force_streamed=False)   # small graph, VMEM-resident phase 2
    check(16, force_streamed=True)    # streamed phase 2, single tile
    check(520, force_streamed=True)   # padded N, multi-tile phase 1 + phase 2
    print("KERNEL_OK")
</pallas_src>

<mosaic_0001>
module attributes {stable_mosaic.version = 11 : i64} {
  func.func @_proj_kernel(%arg0: i32, %arg1: memref<16x768xf32, #tpu.memory_space<vmem>>, %arg2: memref<16x768xf32, #tpu.memory_space<vmem>>, %arg3: memref<16x768xf32, #tpu.memory_space<vmem>>, %arg4: memref<16x12xf32, #tpu.memory_space<vmem>>, %arg5: memref<3x768x16xbf16, #tpu.memory_space<vmem>>, %arg6: memref<12x16xbf16, #tpu.memory_space<vmem>>, %arg7: memref<1x64xf32, #tpu.memory_space<vmem>>, %arg8: memref<64x64xbf16, #tpu.memory_space<vmem>>, %arg9: memref<1x64xf32, #tpu.memory_space<vmem>>, %arg10: memref<16x128xf32, #tpu.memory_space<vmem>>) attributes {dimension_semantics = [#tpu.dimension_semantics<parallel>], iteration_bounds = array<i64: 1>, scalar_prefetch = 0 : i64, scratch_operands = 0 : i64, tpu.core_type = #tpu.core_type<tc>, window_params = [{transform_indices = @transform_0, window_bounds = array<i64: 16, 768>}, {transform_indices = @transform_1, window_bounds = array<i64: 16, 768>}, {transform_indices = @transform_2, window_bounds = array<i64: 16, 768>}, {transform_indices = @transform_3, window_bounds = array<i64: 16, 12>}, {pipeline_mode = #tpu.pipeline_mode<synchronous>, transform_indices = @transform_4, window_bounds = array<i64: 3, 768, 16>}, {pipeline_mode = #tpu.pipeline_mode<synchronous>, transform_indices = @transform_5, window_bounds = array<i64: 12, 16>}, {pipeline_mode = #tpu.pipeline_mode<synchronous>, transform_indices = @transform_6, window_bounds = array<i64: 1, 64>}, {pipeline_mode = #tpu.pipeline_mode<synchronous>, transform_indices = @transform_7, window_bounds = array<i64: 64, 64>}, {pipeline_mode = #tpu.pipeline_mode<synchronous>, transform_indices = @transform_8, window_bounds = array<i64: 1, 64>}, {transform_indices = @transform_9, window_bounds = array<i64: 16, 128>}]} {
    %c0 = arith.constant 0 : index
    %c0_0 = arith.constant 0 : index
    %0 = vector.load %arg1[%c0, %c0_0] : memref<16x768xf32, #tpu.memory_space<vmem>>, vector<16x768xf32>
    %1 = arith.truncf %0 : vector<16x768xf32> to vector<16x768xbf16>
    %c0_1 = arith.constant 0 : index
    %c0_2 = arith.constant 0 : index
    %c0_3 = arith.constant 0 : index
    %2 = vector.load %arg5[%c0_1, %c0_2, %c0_3] : memref<3x768x16xbf16, #tpu.memory_space<vmem>>, vector<1x768x16xbf16>
    %3 = vector.shape_cast %2 : vector<1x768x16xbf16> to vector<768x16xbf16>
    %cst = arith.constant dense<0.000000e+00> : vector<16x16xf32>
    %4 = tpu.matmul %1, %3, %cst {dimension_numbers = #tpu.dot_dimension_numbers<[1], [0], [0], [1], [0, 0, 1, 1], [], []>} : vector<16x768xbf16>, vector<768x16xbf16>, vector<16x16xf32> -> vector<16x16xf32>
    %c0_4 = arith.constant 0 : index
    %c0_5 = arith.constant 0 : index
    %5 = vector.load %arg2[%c0_4, %c0_5] : memref<16x768xf32, #tpu.memory_space<vmem>>, vector<16x768xf32>
    %6 = arith.truncf %5 : vector<16x768xf32> to vector<16x768xbf16>
    %c1 = arith.constant 1 : index
    %c0_6 = arith.constant 0 : index
    %c0_7 = arith.constant 0 : index
    %7 = vector.load %arg5[%c1, %c0_6, %c0_7] : memref<3x768x16xbf16, #tpu.memory_space<vmem>>, vector<1x768x16xbf16>
    %8 = vector.shape_cast %7 : vector<1x768x16xbf16> to vector<768x16xbf16>
    %cst_8 = arith.constant dense<0.000000e+00> : vector<16x16xf32>
    %9 = tpu.matmul %6, %8, %cst_8 {dimension_numbers = #tpu.dot_dimension_numbers<[1], [0], [0], [1], [0, 0, 1, 1], [], []>} : vector<16x768xbf16>, vector<768x16xbf16>, vector<16x16xf32> -> vector<16x16xf32>
    %c0_9 = arith.constant 0 : index
    %c0_10 = arith.constant 0 : index
    %10 = vector.load %arg3[%c0_9, %c0_10] : memref<16x768xf32, #tpu.memory_space<vmem>>, vector<16x768xf32>
    %11 = arith.truncf %10 : vector<16x768xf32> to vector<16x768xbf16>
    %c2 = arith.constant 2 : index
    %c0_11 = arith.constant 0 : index
    %c0_12 = arith.constant 0 : index
    %12 = vector.load %arg5[%c2, %c0_11, %c0_12] : memref<3x768x16xbf16, #tpu.memory_space<vmem>>, vector<1x768x16xbf16>
    %13 = vector.shape_cast %12 : vector<1x768x16xbf16> to vector<768x16xbf16>
    %cst_13 = arith.constant dense<0.000000e+00> : vector<16x16xf32>
    %14 = tpu.matmul %11, %13, %cst_13 {dimension_numbers = #tpu.dot_dimension_numbers<[1], [0], [0], [1], [0, 0, 1, 1], [], []>} : vector<16x768xbf16>, vector<768x16xbf16>, vector<16x16xf32> -> vector<16x16xf32>
    %c0_14 = arith.constant 0 : index
    %c0_15 = arith.constant 0 : index
    %15 = vector.load %arg4[%c0_14, %c0_15] : memref<16x12xf32, #tpu.memory_space<vmem>>, vector<16x12xf32>
    %16 = arith.truncf %15 : vector<16x12xf32> to vector<16x12xbf16>
    %c0_16 = arith.constant 0 : index
    %c0_17 = arith.constant 0 : index
    %17 = vector.load %arg6[%c0_16, %c0_17] : memref<12x16xbf16, #tpu.memory_space<vmem>>, vector<12x16xbf16>
    %cst_18 = arith.constant dense<0.000000e+00> : vector<16x16xf32>
    %18 = tpu.matmul %16, %17, %cst_18 {dimension_numbers = #tpu.dot_dimension_numbers<[1], [0], [0], [1], [0, 0, 1, 1], [], []>} : vector<16x12xbf16>, vector<12x16xbf16>, vector<16x16xf32> -> vector<16x16xf32>
    %19 = tpu.concatenate %4, %9, %14, %18 in 1 : vector<16x16xf32>, vector<16x16xf32>, vector<16x16xf32>, vector<16x16xf32> -> vector<16x64xf32>
    %c0_19 = arith.constant 0 : index
    %c0_20 = arith.constant 0 : index
    %20 = vector.load %arg7[%c0_19, %c0_20] : memref<1x64xf32, #tpu.memory_space<vmem>>, vector<1x64xf32>
    %21 = vector.broadcast %20 : vector<1x64xf32> to vector<16x64xf32>
    %22 = arith.addf %19, %21 : vector<16x64xf32>
    %cst_21 = arith.constant 0.000000e+00 : f32
    %23 = vector.broadcast %cst_21 : f32 to vector<16x64xf32>
    %24 = arith.cmpf ogt, %22, %23 : vector<16x64xf32>
    %cst_22 = arith.constant 0.00999999977 : f32
    %25 = vector.broadcast %cst_22 : f32 to vector<16x64xf32>
    %26 = arith.mulf %25, %22 : vector<16x64xf32>
    %27 = arith.select %24, %22, %26 : vector<16x64xi1>, vector<16x64xf32>
    %28 = arith.truncf %27 : vector<16x64xf32> to vector<16x64xbf16>
    %c0_23 = arith.constant 0 : index
    %c0_24 = arith.constant 0 : index
    %29 = vector.load %arg8[%c0_23, %c0_24] : memref<64x64xbf16, #tpu.memory_space<vmem>>, vector<64x64xbf16>
    %cst_25 = arith.constant dense<0.000000e+00> : vector<16x64xf32>
    %30 = tpu.matmul %28, %29, %cst_25 {dimension_numbers = #tpu.dot_dimension_numbers<[1], [0], [0], [1], [0, 0, 1, 1], [], []>} : vector<16x64xbf16>, vector<64x64xbf16>, vector<16x64xf32> -> vector<16x64xf32>
    %c0_26 = arith.constant 0 : index
    %c0_27 = arith.constant 0 : index
    %31 = vector.load %arg9[%c0_26, %c0_27] : memref<1x64xf32, #tpu.memory_space<vmem>>, vector<1x64xf32>
    %32 = vector.broadcast %31 : vector<1x64xf32> to vector<16x64xf32>
    %33 = arith.addf %30, %32 : vector<16x64xf32>
    %cst_28 = arith.constant 0.000000e+00 : f32
    %34 = vector.broadcast %cst_28 : f32 to vector<16x64xf32>
    %35 = arith.cmpf ogt, %33, %34 : vector<16x64xf32>
    %cst_29 = arith.constant 0.00999999977 : f32
    %36 = vector.broadcast %cst_29 : f32 to vector<16x64xf32>
    %37 = arith.mulf %36, %33 : vector<16x64xf32>
    %38 = arith.select %35, %33, %37 : vector<16x64xi1>, vector<16x64xf32>
    %39 = tpu.concatenate %27, %38 in 1 : vector<16x64xf32>, vector<16x64xf32> -> vector<16x128xf32>
    %c0_30 = arith.constant 0 : index
    %c0_31 = arith.constant 0 : index
    %40 = vector.load %arg10[%c0_30, %c0_31] : memref<16x128xf32, #tpu.memory_space<vmem>>, vector<16x128xf32>
    tpu.vector_store %arg10[%c0_30, %c0_31], %39 {strides = array<i32>} : memref<16x128xf32, #tpu.memory_space<vmem>>, vector<16x128xf32>,
    return
  }
  func.func @transform_0(%arg0: i32) -> (i32, i32) {
    %c0_i32 = arith.constant 0 : i32
    %c0_i32_0 = arith.constant 0 : i32
    return %arg0, %c0_i32 : i32, i32
  }
  func.func @transform_1(%arg0: i32) -> (i32, i32) {
    %c0_i32 = arith.constant 0 : i32
    %c0_i32_0 = arith.constant 0 : i32
    return %arg0, %c0_i32 : i32, i32
  }
  func.func @transform_2(%arg0: i32) -> (i32, i32) {
    %c0_i32 = arith.constant 0 : i32
    %c0_i32_0 = arith.constant 0 : i32
    return %arg0, %c0_i32 : i32, i32
  }
  func.func @transform_3(%arg0: i32) -> (i32, i32) {
    %c0_i32 = arith.constant 0 : i32
    %c0_i32_0 = arith.constant 0 : i32
    return %arg0, %c0_i32 : i32, i32
  }
  func.func @transform_4(%arg0: i32) -> (i32, i32, i32) {
    %c0_i32 = arith.constant 0 : i32
    %c0_i32_0 = arith.constant 0 : i32
    %c0_i32_1 = arith.constant 0 : i32
    %c0_i32_2 = arith.constant 0 : i32
    return %c0_i32, %c0_i32_0, %c0_i32_1 : i32, i32, i32
  }
  func.func @transform_5(%arg0: i32) -> (i32, i32) {
    %c0_i32 = arith.constant 0 : i32
    %c0_i32_0 = arith.constant 0 : i32
    %c0_i32_1 = arith.constant 0 : i32
    return %c0_i32, %c0_i32_0 : i32, i32
  }
  func.func @transform_6(%arg0: i32) -> (i32, i32) {
    %c0_i32 = arith.constant 0 : i32
    %c0_i32_0 = arith.constant 0 : i32
    %c0_i32_1 = arith.constant 0 : i32
    return %c0_i32, %c0_i32_0 : i32, i32
  }
  func.func @transform_7(%arg0: i32) -> (i32, i32) {
    %c0_i32 = arith.constant 0 : i32
    %c0_i32_0 = arith.constant 0 : i32
    %c0_i32_1 = arith.constant 0 : i32
    return %c0_i32, %c0_i32_0 : i32, i32
  }
  func.func @transform_8(%arg0: i32) -> (i32, i32) {
    %c0_i32 = arith.constant 0 : i32
    %c0_i32_0 = arith.constant 0 : i32
    %c0_i32_1 = arith.constant 0 : i32
    return %c0_i32, %c0_i32_0 : i32, i32
  }
  func.func @transform_9(%arg0: i32) -> (i32, i32) {
    %c0_i32 = arith.constant 0 : i32
    %c0_i32_0 = arith.constant 0 : i32
    return %arg0, %c0_i32 : i32, i32
  }
}

</mosaic_0001>

<llo_original>
// kernel: tpu_custom_call.1
$region0: #{tpu_custom_call.1}
  #allocation0 [shape = 'u32[]', space=smem, size = 0x4, offset = 0x4, fixed_abs, tag = 'smem constant byte address 0x4 - core index']
  #allocation1 [shape = 'u32[144,128]{1,0:T(1,128)}', space=vmem, size = 0x12000, scoped, tag = 'internal scratch']
  %s0 = inlined_call_operand.vmem [shape: f32[16,768], index: 0, kind: input, shape index: {}]
  %s1 = inlined_call_operand.vmem [shape: f32[16,768], index: 1, kind: input, shape index: {}]
  %s2 = inlined_call_operand.vmem [shape: f32[16,768], index: 2, kind: input, shape index: {}]
  %s3 = inlined_call_operand.vmem [shape: f32[16,12], index: 3, kind: input, shape index: {}]
  %s4 = inlined_call_operand.vmem [shape: bf16[3,768,16], index: 4, kind: input, shape index: {}]
  %s5 = inlined_call_operand.vmem [shape: bf16[12,16], index: 5, kind: input, shape index: {}]
  %s6 = inlined_call_operand.vmem [shape: f32[1,64], index: 6, kind: input, shape index: {}]
  %s7 = inlined_call_operand.vmem [shape: bf16[64,64], index: 7, kind: input, shape index: {}]
  %s8 = inlined_call_operand.vmem [shape: f32[1,64], index: 8, kind: input, shape index: {}]
  %s9 = inlined_call_operand.hbm [shape: f32[16,128], index: 9, kind: output, shape index: {}]
  %s10 = sld [smem:[#allocation0]]
  $region46: #{tpu_custom_call.1} parent=0
    _
  %s12 = ssub.s32 1, %s10
  %s13 = scalar_select 0, %s12, %s10
  $region1: #{tpu_custom_call.1} parent=0
    #allocation2 [shape = 'u8[8192]{0}', space=vmem, size = 0x2000, scoped, tag = 'output window, operand 0, single buffered']
    #allocation3 [shape = 's32[1]{0}', space=sflag, size = 0x4, scoped, tag = 'scoped memory for tpu_custom_call.1']
    %14 = vsyncpa [#allocation3], 0
    // Predicated region
    $region2: #{tpu_custom_call.1} parent=1 // pred_check
      _
    $region3: #{tpu_custom_call.1} parent=1 // pred_check_branch
      %16 = sbr.rel (0) target = $region5
    $region4: #{tpu_custom_call.1} parent=1 // pred_region
      _
    $region5: #{tpu_custom_call.1} parent=1 // pred_fallthru
      _
    // Predicated region
    $region6: #{tpu_custom_call.1} parent=1 // pred_check
      _
    $region7: #{tpu_custom_call.1} parent=1 // pred_check_branch
      %18 = sbr.rel (0) target = $region9
    $region8: #{tpu_custom_call.1} parent=1 // pred_region
      _
    $region9: #{tpu_custom_call.1} parent=1 // pred_fallthru
      _
    // Predicated region
    $region10: #{tpu_custom_call.1} parent=1 // pred_check
      _
    $region11: #{tpu_custom_call.1} parent=1 // pred_check_branch
      %20 = sbr.rel (0) target = $region13
    $region12: #{tpu_custom_call.1} parent=1 // pred_region
      _
    $region13: #{tpu_custom_call.1} parent=1 // pred_fallthru
      _
    // Predicated region
    $region14: #{tpu_custom_call.1} parent=1 // pred_check
      _
    $region15: #{tpu_custom_call.1} parent=1 // pred_check_branch
      %22 = sbr.rel (0) target = $region17
    $region16: #{tpu_custom_call.1} parent=1 // pred_region
      _
    $region17: #{tpu_custom_call.1} parent=1 // pred_fallthru
      _
    // Predicated region
    $region18: #{tpu_custom_call.1} parent=1 // pred_check
      _
    $region19: #{tpu_custom_call.1} parent=1 // pred_check_branch
      %24 = sbr.rel (0) target = $region21
    $region20: #{tpu_custom_call.1} parent=1 // pred_region
      _
    $region21: #{tpu_custom_call.1} parent=1 // pred_fallthru
      _
    // Predicated region
    $region22: #{tpu_custom_call.1} parent=1 // pred_check
      _
    $region23: #{tpu_custom_call.1} parent=1 // pred_check_branch
      %26 = sbr.rel (0) target = $region25
    $region24: #{tpu_custom_call.1} parent=1 // pred_region
      _
    $region25: #{tpu_custom_call.1} parent=1 // pred_fallthru
      _
    // Predicated region
    $region26: #{tpu_custom_call.1} parent=1 // pred_check
      _
    $region27: #{tpu_custom_call.1} parent=1 // pred_check_branch
      %28 = sbr.rel (0) target = $region29
    $region28: #{tpu_custom_call.1} parent=1 // pred_region
      _
    $region29: #{tpu_custom_call.1} parent=1 // pred_fallthru
      _
    // Predicated region
    $region30: #{tpu_custom_call.1} parent=1 // pred_check
      _
    $region31: #{tpu_custom_call.1} parent=1 // pred_check_branch
      %30 = sbr.rel (0) target = $region33
    $region32: #{tpu_custom_call.1} parent=1 // pred_region
      _
    $region33: #{tpu_custom_call.1} parent=1 // pred_fallthru
      _
    // Predicated region
    $region34: #{tpu_custom_call.1} parent=1 // pred_check
      _
    $region35: #{tpu_custom_call.1} parent=1 // pred_check_branch
      %32 = sbr.rel (0) target = $region37
    $region36: #{tpu_custom_call.1} parent=1 // pred_region
      _
    $region37: #{tpu_custom_call.1} parent=1 // pred_fallthru
      _
    %v34 = vld [vmem:[%s0] sm:$0xff]
    %v35 = vld [vmem:[%s0 + $0x8] sm:$0xff]
    %v36 = vld [vmem:[%s0 + $0x10] sm:$0xff]
    %v37 = vld [vmem:[%s0 + $0x18] sm:$0xff]
    %v38 = vld [vmem:[%s0 + $0x20] sm:$0xff]
    %v39 = vld [vmem:[%s0 + $0x28] sm:$0xff]
    %v40 = vld [vmem:[%s0 + $0x30] sm:$0xff]
    %v41 = vld [vmem:[%s0 + $0x38] sm:$0xff]
    %v42 = vld [vmem:[%s0 + $0x40] sm:$0xff]
    %v43 = vld [vmem:[%s0 + $0x48] sm:$0xff]
    %v44 = vld [vmem:[%s0 + $0x50] sm:$0xff]
    %v45 = vld [vmem:[%s0 + $0x58] sm:$0xff]
    %v46 = vpack.c.bf16 %v40, %v34
    %v47 = vpack.c.bf16 %v41, %v35
    %v48 = vpack.c.bf16 %v42, %v36
    %v49 = vpack.c.bf16 %v43, %v37
    %v50 = vpack.c.bf16 %v44, %v38
    %v51 = vpack.c.bf16 %v45, %v39
    %v52 = vld [vmem:[%s4] sm:$0xf]
    %v53 = vld [vmem:[%s4 + $0x4] sm:$0xf]
    %v54 = vld [vmem:[%s4 + $0x8] sm:$0xf]
    %v55 = vld [vmem:[%s4 + $0xc] sm:$0xf]
    %v56 = vld [vmem:[%s4 + $0x10] sm:$0xf]
    %v57 = vld [vmem:[%s4 + $0x14] sm:$0xf]
    %v58 = vld [vmem:[%s4 + $0x18] sm:$0xf]
    %v59 = vld [vmem:[%s4 + $0x1c] sm:$0xf]
    %v60 = vld [vmem:[%s4 + $0x20] sm:$0xf]
    %v61 = vld [vmem:[%s4 + $0x24] sm:$0xf]
    %v62 = vld [vmem:[%s4 + $0x28] sm:$0xf]
    %v63 = vld [vmem:[%s4 + $0x2c] sm:$0xf]
    %v64 = vld [vmem:[%s4 + $0x30] sm:$0xf]
    %v65 = vld [vmem:[%s4 + $0x34] sm:$0xf]
    %v66 = vld [vmem:[%s4 + $0x38] sm:$0xf]
    %v67 = vld [vmem:[%s4 + $0x3c] sm:$0xf]
    %v68 = vld [vmem:[%s4 + $0x40] sm:$0xf]
    %v69 = vld [vmem:[%s4 + $0x44] sm:$0xf]
    %v70 = vld [vmem:[%s4 + $0x48] sm:$0xf]
    %v71 = vld [vmem:[%s4 + $0x4c] sm:$0xf]
    %v72 = vld [vmem:[%s4 + $0x50] sm:$0xf]
    %v73 = vld [vmem:[%s4 + $0x54] sm:$0xf]
    %v74 = vld [vmem:[%s4 + $0x58] sm:$0xf]
    %v75 = vld [vmem:[%s4 + $0x5c] sm:$0xf]
    %v76 = vld [vmem:[%s4 + $0x60] sm:$0xf]
    %v77 = vld [vmem:[%s4 + $0x64] sm:$0xf]
    %v78 = vld [vmem:[%s4 + $0x68] sm:$0xf]
    %v79 = vld [vmem:[%s4 + $0x6c] sm:$0xf]
    %v80 = vld [vmem:[%s4 + $0x70] sm:$0xf]
    %v81 = vld [vmem:[%s4 + $0x74] sm:$0xf]
    %v82 = vld [vmem:[%s4 + $0x78] sm:$0xf]
    %v83 = vld [vmem:[%s4 + $0x7c] sm:$0xf]
    %v84 = vld [vmem:[%s4 + $0x80] sm:$0xf]
    %v85 = vld [vmem:[%s4 + $0x84] sm:$0xf]
    %v86 = vld [vmem:[%s4 + $0x88] sm:$0xf]
    %v87 = vld [vmem:[%s4 + $0x8c] sm:$0xf]
    %v88 = vld [vmem:[%s4 + $0x90] sm:$0xf]
    %v89 = vld [vmem:[%s4 + $0x94] sm:$0xf]
    %v90 = vld [vmem:[%s4 + $0x98] sm:$0xf]
    %v91 = vld [vmem:[%s4 + $0x9c] sm:$0xf]
    %v92 = vld [vmem:[%s4 + $0xa0] sm:$0xf]
    %v93 = vld [vmem:[%s4 + $0xa4] sm:$0xf]
    %v94 = vld [vmem:[%s4 + $0xa8] sm:$0xf]
    %v95 = vld [vmem:[%s4 + $0xac] sm:$0xf]
    %v96 = vld [vmem:[%s4 + $0xb0] sm:$0xf]
    %v97 = vld [vmem:[%s4 + $0xb4] sm:$0xf]
    %v98 = vld [vmem:[%s4 + $0xb8] sm:$0xf]
    %v99 = vld [vmem:[%s4 + $0xbc] sm:$0xf]
    %v100 = vld [vmem:[%s4 + $0xc0] sm:$0xf]
    %v101 = vld [vmem:[%s4 + $0xc4] sm:$0xf]
    %v102 = vld [vmem:[%s4 + $0xc8] sm:$0xf]
    %v103 = vld [vmem:[%s4 + $0xcc] sm:$0xf]
    %v104 = vld [vmem:[%s4 + $0xd0] sm:$0xf]
    %v105 = vld [vmem:[%s4 + $0xd4] sm:$0xf]
    %v106 = vld [vmem:[%s4 + $0xd8] sm:$0xf]
    %v107 = vld [vmem:[%s4 + $0xdc] sm:$0xf]
    %v108 = vld [vmem:[%s4 + $0xe0] sm:$0xf]
    %v109 = vld [vmem:[%s4 + $0xe4] sm:$0xf]
    %v110 = vld [vmem:[%s4 + $0xe8] sm:$0xf]
    %v111 = vld [vmem:[%s4 + $0xec] sm:$0xf]
    %v112 = vld [vmem:[%s4 + $0xf0] sm:$0xf]
    %v113 = vld [vmem:[%s4 + $0xf4] sm:$0xf]
    %v114 = vld [vmem:[%s4 + $0xf8] sm:$0xf]
    %v115 = vld [vmem:[%s4 + $0xfc] sm:$0xf]
    %v116 = vld [vmem:[%s4 + $0x100] sm:$0xf]
    %v117 = vld [vmem:[%s4 + $0x104] sm:$0xf]
    %v118 = vld [vmem:[%s4 + $0x108] sm:$0xf]
    %v119 = vld [vmem:[%s4 + $0x10c] sm:$0xf]
    %v120 = vld [vmem:[%s4 + $0x110] sm:$0xf]
    %v121 = vld [vmem:[%s4 + $0x114] sm:$0xf]
    %v122 = vld [vmem:[%s4 + $0x118] sm:$0xf]
    %v123 = vld [vmem:[%s4 + $0x11c] sm:$0xf]
    %v124 = vld [vmem:[%s4 + $0x120] sm:$0xf]
    %v125 = vld [vmem:[%s4 + $0x124] sm:$0xf]
    %v126 = vld [vmem:[%s4 + $0x128] sm:$0xf]
    %v127 = vld [vmem:[%s4 + $0x12c] sm:$0xf]
    %v128 = vld [vmem:[%s4 + $0x130] sm:$0xf]
    %v129 = vld [vmem:[%s4 + $0x134] sm:$0xf]
    %v130 = vld [vmem:[%s4 + $0x138] sm:$0xf]
    %v131 = vld [vmem:[%s4 + $0x13c] sm:$0xf]
    %v132 = vld [vmem:[%s4 + $0x140] sm:$0xf]
    %v133 = vld [vmem:[%s4 + $0x144] sm:$0xf]
    %v134 = vld [vmem:[%s4 + $0x148] sm:$0xf]
    %v135 = vld [vmem:[%s4 + $0x14c] sm:$0xf]
    %v136 = vld [vmem:[%s4 + $0x150] sm:$0xf]
    %v137 = vld [vmem:[%s4 + $0x154] sm:$0xf]
    %v138 = vld [vmem:[%s4 + $0x158] sm:$0xf]
    %v139 = vld [vmem:[%s4 + $0x15c] sm:$0xf]
    %v140 = vld [vmem:[%s4 + $0x160] sm:$0xf]
    %v141 = vld [vmem:[%s4 + $0x164] sm:$0xf]
    %v142 = vld [vmem:[%s4 + $0x168] sm:$0xf]
    %v143 = vld [vmem:[%s4 + $0x16c] sm:$0xf]
    %v144 = vld [vmem:[%s4 + $0x170] sm:$0xf]
    %v145 = vld [vmem:[%s4 + $0x174] sm:$0xf]
    %v146 = vld [vmem:[%s4 + $0x178] sm:$0xf]
    %v147 = vld [vmem:[%s4 + $0x17c] sm:$0xf]
    %v244 = vunpack.c.l.b16 %v52
    %v245 = vunpack.c.l.b16 %v53
    %v246 = vunpack.c.l.b16 %v54
    %v247 = vunpack.c.l.b16 %v55
    %v248 = vunpack.c.l.b16 %v56
    %v249 = vunpack.c.l.b16 %v57
    %v250 = vunpack.c.l.b16 %v58
    %v251 = vunpack.c.l.b16 %v59
    %v252 = vunpack.c.l.b16 %v60
    %v253 = vunpack.c.l.b16 %v61
    %v254 = vunpack.c.l.b16 %v62
    %v255 = vunpack.c.l.b16 %v63
    %v256 = vunpack.c.l.b16 %v64
    %v257 = vunpack.c.l.b16 %v65
    %v258 = vunpack.c.l.b16 %v66
    %v259 = vunpack.c.l.b16 %v67
    %v260 = vunpack.c.l.b16 %v68
    %v261 = vunpack.c.l.b16 %v69
    %v262 = vunpack.c.l.b16 %v70
    %v263 = vunpack.c.l.b16 %v71
    %v264 = vunpack.c.l.b16 %v72
    %v265 = vunpack.c.l.b16 %v73
    %v266 = vunpack.c.l.b16 %v74
    %v267 = vunpack.c.l.b16 %v75
    %v268 = vunpack.c.l.b16 %v76
    %v269 = vunpack.c.l.b16 %v77
    %v270 = vunpack.c.l.b16 %v78
    %v271 = vunpack.c.l.b16 %v79
    %v272 = vunpack.c.l.b16 %v80
    %v273 = vunpack.c.l.b16 %v81
    %v274 = vunpack.c.l.b16 %v82
    %v275 = vunpack.c.l.b16 %v83
    %v276 = vunpack.c.l.b16 %v84
    %v277 = vunpack.c.l.b16 %v85
    %v278 = vunpack.c.l.b16 %v86
    %v279 = vunpack.c.l.b16 %v87
    %v280 = vunpack.c.l.b16 %v88
    %v281 = vunpack.c.l.b16 %v89
    %v282 = vunpack.c.l.b16 %v90
    %v283 = vunpack.c.l.b16 %v91
    %v284 = vunpack.c.l.b16 %v92
    %v285 = vunpack.c.l.b16 %v93
    %v286 = vunpack.c.l.b16 %v94
    %v287 = vunpack.c.l.b16 %v95
    %v288 = vunpack.c.l.b16 %v96
    %v289 = vunpack.c.l.b16 %v97
    %v290 = vunpack.c.l.b16 %v98
    %v291 = vunpack.c.l.b16 %v99
    %v292 = vunpack.c.l.b16 %v100
    %v293 = vunpack.c.l.b16 %v101
    %v294 = vunpack.c.l.b16 %v102
    %v295 = vunpack.c.l.b16 %v103
    %v296 = vunpack.c.l.b16 %v104
    %v297 = vunpack.c.l.b16 %v105
    %v298 = vunpack.c.l.b16 %v106
    %v299 = vunpack.c.l.b16 %v107
    %v300 = vunpack.c.l.b16 %v108
    %v301 = vunpack.c.l.b16 %v109
    %v302 = vunpack.c.l.b16 %v110
    %v303 = vunpack.c.l.b16 %v111
    %v304 = vunpack.c.l.b16 %v112
    %v305 = vunpack.c.l.b16 %v113
    %v306 = vunpack.c.l.b16 %v114
    %v307 = vunpack.c.l.b16 %v115
    %v308 = vunpack.c.l.b16 %v116
    %v309 = vunpack.c.l.b16 %v117
    %v310 = vunpack.c.l.b16 %v118
    %v311 = vunpack.c.l.b16 %v119
    %v312 = vunpack.c.l.b16 %v120
    %v313 = vunpack.c.l.b16 %v121
    %v314 = vunpack.c.l.b16 %v122
    %v315 = vunpack.c.l.b16 %v123
    %v316 = vunpack.c.l.b16 %v124
    %v317 = vunpack.c.l.b16 %v125
    %v318 = vunpack.c.l.b16 %v126
    %v319 = vunpack.c.l.b16 %v127
    %v320 = vunpack.c.l.b16 %v128
    %v321 = vunpack.c.l.b16 %v129
    %v322 = vunpack.c.l.b16 %v130
    %v323 = vunpack.c.l.b16 %v131
    %v324 = vunpack.c.l.b16 %v132
    %v325 = vunpack.c.l.b16 %v133
    %v326 = vunpack.c.l.b16 %v134
    %v327 = vunpack.c.l.b16 %v135
    %v328 = vunpack.c.l.b16 %v136
    %v329 = vunpack.c.l.b16 %v137
    %v330 = vunpack.c.l.b16 %v138
    %v331 = vunpack.c.l.b16 %v139
    %v332 = vunpack.c.l.b16 %v140
    %v333 = vunpack.c.l.b16 %v141
    %v334 = vunpack.c.l.b16 %v142
    %v335 = vunpack.c.l.b16 %v143
    %v336 = vunpack.c.l.b16 %v144
    %v337 = vunpack.c.l.b16 %v145
    %v338 = vunpack.c.l.b16 %v146
    %v339 = vunpack.c.l.b16 %v147
    %v340 = vpack.c.b16 %v245, %v244
    %v341 = vpack.c.b16 %v247, %v246
    %v342 = vpack.c.b16 %v249, %v248
    %v343 = vpack.c.b16 %v251, %v250
    %v344 = vpack.c.b16 %v253, %v252
    %v345 = vpack.c.b16 %v255, %v254
    %v346 = vpack.c.b16 %v257, %v256
    %v347 = vpack.c.b16 %v259, %v258
    %v348 = vpack.c.b16 %v261, %v260
    %v349 = vpack.c.b16 %v263, %v262
    %v350 = vpack.c.b16 %v265, %v264
    %v351 = vpack.c.b16 %v267, %v266
    %v352 = vpack.c.b16 %v269, %v268
    %v353 = vpack.c.b16 %v271, %v270
    %v354 = vpack.c.b16 %v273, %v272
    %v355 = vpack.c.b16 %v275, %v274
    %v356 = vpack.c.b16 %v277, %v276
    %v357 = vpack.c.b16 %v279, %v278
    %v358 = vpack.c.b16 %v281, %v280
    %v359 = vpack.c.b16 %v283, %v282
    %v360 = vpack.c.b16 %v285, %v284
    %v361 = vpack.c.b16 %v287, %v286
    %v362 = vpack.c.b16 %v289, %v288
    %v363 = vpack.c.b16 %v291, %v290
    %v364 = vpack.c.b16 %v293, %v292
    %v365 = vpack.c.b16 %v295, %v294
    %v366 = vpack.c.b16 %v297, %v296
    %v367 = vpack.c.b16 %v299, %v298
    %v368 = vpack.c.b16 %v301, %v300
    %v369 = vpack.c.b16 %v303, %v302
    %v370 = vpack.c.b16 %v305, %v304
    %v371 = vpack.c.b16 %v307, %v306
    %v372 = vpack.c.b16 %v309, %v308
    %v373 = vpack.c.b16 %v311, %v310
    %v374 = vpack.c.b16 %v313, %v312
    %v375 = vpack.c.b16 %v315, %v314
    %v376 = vpack.c.b16 %v317, %v316
    %v377 = vpack.c.b16 %v319, %v318
    %v378 = vpack.c.b16 %v321, %v320
    %v379 = vpack.c.b16 %v323, %v322
    %v380 = vpack.c.b16 %v325, %v324
    %v381 = vpack.c.b16 %v327, %v326
    %v382 = vpack.c.b16 %v329, %v328
    %v383 = vpack.c.b16 %v331, %v330
    %v384 = vpack.c.b16 %v333, %v332
    %v385 = vpack.c.b16 %v335, %v334
    %v386 = vpack.c.b16 %v337, %v336
    %v387 = vpack.c.b16 %v339, %v338
    %436 = vmatprep.subr.bf16.mxu0 0
    %437 = vmatpush1.bf16.msra.mxu0 %v340
    %438 = vmatprep.subr.bf16.mxu0 0
    %439 = vmatpush1.bf16.msra.mxu0 %v341
    %440 = vmatprep.subr.bf16.mxu0 0
    %441 = vmatpush1.bf16.msra.mxu0 %v342
    %442 = vmatprep.subr.bf16.mxu0 0
    %443 = vmatpush1.bf16.msra.mxu0 %v343
    %444 = vmatprep.subr.bf16.mxu0 0
    %445 = vmatpush1.bf16.msra.mxu0 %v344
    %446 = vmatprep.subr.bf16.mxu0 0
    %447 = vmatpush1.bf16.msra.mxu0 %v345
    %448 = vmatprep.subr.bf16.mxu0 0
    %449 = vmatpush1.bf16.msra.mxu0 %v346
    %450 = vmatprep.subr.bf16.mxu0 0
    %451 = vmatpush1.bf16.msra.mxu0 %v347
    %452 = vmatprep.subr.bf16.mxu0 0
    %453 = vmatpush1.bf16.msra.mxu0 %v348
    %454 = vmatprep.subr.bf16.mxu0 0
    %455 = vmatpush1.bf16.msra.mxu0 %v349
    %456 = vmatprep.subr.bf16.mxu0 0
    %457 = vmatpush1.bf16.msra.mxu0 %v350
    %458 = vmatprep.subr.bf16.mxu0 0
    %459 = vmatpush1.bf16.msra.mxu0 %v351
    %460 = vmatprep.subr.bf16.mxu0 0
    %461 = vmatpush1.bf16.msra.mxu0 %v352
    %462 = vmatprep.subr.bf16.mxu0 0
    %463 = vmatpush1.bf16.msra.mxu0 %v353
    %464 = vmatprep.subr.bf16.mxu0 0
    %465 = vmatpush1.bf16.msra.mxu0 %v354
    %466 = vmatprep.subr.bf16.mxu0 0
    %467 = vmatpush1.bf16.msra.mxu0 %v355
    %468 = vmatprep.mubr.bf16.mxu0 %v47
    %469 = vmatmul.mubr.bf16.gmra.mrb[0].mxu0 %v46
    %v470 = vpop.f32.mrb[0].mxu0
    %v471 = vadd.f32 0.0, %v470
    %v472 = vpop.f32.mrb[0].mxu0
    %v473 = vpop.f32.mrb[0].mxu0
    %v474 = vadd.f32 0.0, %v473
    %v475 = vpop.f32.mrb[0].mxu0
    %476 = vdwg.mxu0
    %477 = vmatprep.subr.bf16.mxu0 0
    %478 = vmatpush1.bf16.msra.mxu0 %v356
    %479 = vmatprep.subr.bf16.mxu0 0
    %480 = vmatpush1.bf16.msra.mxu0 %v357
    %481 = vmatprep.subr.bf16.mxu0 0
    %482 = vmatpush1.bf16.msra.mxu0 %v358
    %483 = vmatprep.subr.bf16.mxu0 0
    %484 = vmatpush1.bf16.msra.mxu0 %v359
    %485 = vmatprep.subr.bf16.mxu0 0
    %486 = vmatpush1.bf16.msra.mxu0 %v360
    %487 = vmatprep.subr.bf16.mxu0 0
    %488 = vmatpush1.bf16.msra.mxu0 %v361
    %489 = vmatprep.subr.bf16.mxu0 0
    %490 = vmatpush1.bf16.msra.mxu0 %v362
    %491 = vmatprep.subr.bf16.mxu0 0
    %492 = vmatpush1.bf16.msra.mxu0 %v363
    %493 = vmatprep.subr.bf16.mxu0 0
    %494 = vmatpush1.bf16.msra.mxu0 %v364
    %495 = vmatprep.subr.bf16.mxu0 0
    %496 = vmatpush1.bf16.msra.mxu0 %v365
    %497 = vmatprep.subr.bf16.mxu0 0
    %498 = vmatpush1.bf16.msra.mxu0 %v366
    %499 = vmatprep.subr.bf16.mxu0 0
    %500 = vmatpush1.bf16.msra.mxu0 %v367
    %501 = vmatprep.subr.bf16.mxu0 0
    %502 = vmatpush1.bf16.msra.mxu0 %v368
    %503 = vmatprep.subr.bf16.mxu0 0
    %504 = vmatpush1.bf16.msra.mxu0 %v369
    %505 = vmatprep.subr.bf16.mxu0 0
    %506 = vmatpush1.bf16.msra.mxu0 %v370
    %507 = vmatprep.subr.bf16.mxu0 0
    %508 = vmatpush1.bf16.msra.mxu0 %v371
    %509 = vmatprep.mubr.bf16.mxu0 %v49
    %510 = vmatmul.mubr.bf16.gmra.mrb[0].mxu0 %v48
    %v511 = vpop.f32.mrb[0].mxu0
    %v512 = vadd.f32 %v471, %v511
    %v513 = vpop.f32.mrb[0].mxu0
    %v514 = vpop.f32.mrb[0].mxu0
    %v515 = vadd.f32 %v474, %v514
    %v516 = vpop.f32.mrb[0].mxu0
    %517 = vdwg.mxu0
    %518 = vmatprep.subr.bf16.mxu0 0
    %519 = vmatpush1.bf16.msra.mxu0 %v372
    %520 = vmatprep.subr.bf16.mxu0 0
    %521 = vmatpush1.bf16.msra.mxu0 %v373
    %522 = vmatprep.subr.bf16.mxu0 0
    %523 = vmatpush1.bf16.msra.mxu0 %v374
    %524 = vmatprep.subr.bf16.mxu0 0
    %525 = vmatpush1.bf16.msra.mxu0 %v375
    %526 = vmatprep.subr.bf16.mxu0 0
    %527 = vmatpush1.bf16.msra.mxu0 %v376
    %528 = vmatprep.subr.bf16.mxu0 0
    %529 = vmatpush1.bf16.msra.mxu0 %v377
    %530 = vmatprep.subr.bf16.mxu0 0
    %531 = vmatpush1.bf16.msra.mxu0 %v378
    %532 = vmatprep.subr.bf16.mxu0 0
    %533 = vmatpush1.bf16.msra.mxu0 %v379
    %534 = vmatprep.subr.bf16.mxu0 0
    %535 = vmatpush1.bf16.msra.mxu0 %v380
    %536 = vmatprep.subr.bf16.mxu0 0
    %537 = vmatpush1.bf16.msra.mxu0 %v381
    %538 = vmatprep.subr.bf16.mxu0 0
    %539 = vmatpush1.bf16.msra.mxu0 %v382
    %540 = vmatprep.subr.bf16.mxu0 0
    %541 = vmatpush1.bf16.msra.mxu0 %v383
    %542 = vmatprep.subr.bf16.mxu0 0
    %543 = vmatpush1.bf16.msra.mxu0 %v384
    %544 = vmatprep.subr.bf16.mxu0 0
    %545 = vmatpush1.bf16.msra.mxu0 %v385
    %546 = vmatprep.subr.bf16.mxu0 0
    %547 = vmatpush1.bf16.msra.mxu0 %v386
    %548 = vmatprep.subr.bf16.mxu0 0
    %549 = vmatpush1.bf16.msra.mxu0 %v387
    %550 = vmatprep.mubr.bf16.mxu0 %v51
    %551 = vmatmul.mubr.bf16.gmra.mrb[0].mxu0 %v50
    %v552 = vpop.f32.mrb[0].mxu0
    %v553 = vadd.f32 %v512, %v552
    %v554 = vpop.f32.mrb[0].mxu0
    %v555 = vpop.f32.mrb[0].mxu0
    %v556 = vadd.f32 %v515, %v555
    %v557 = vpop.f32.mrb[0].mxu0
    %558 = vdwg.mxu0
    %v559 = vld [vmem:[%s1] sm:$0xff]
    %v560 = vld [vmem:[%s1 + $0x8] sm:$0xff]
    %v561 = vld [vmem:[%s1 + $0x10] sm:$0xff]
    %v562 = vld [vmem:[%s1 + $0x18] sm:$0xff]
    %v563 = vld [vmem:[%s1 + $0x20] sm:$0xff]
    %v564 = vld [vmem:[%s1 + $0x28] sm:$0xff]
    %v565 = vld [vmem:[%s1 + $0x30] sm:$0xff]
    %v566 = vld [vmem:[%s1 + $0x38] sm:$0xff]
    %v567 = vld [vmem:[%s1 + $0x40] sm:$0xff]
    %v568 = vld [vmem:[%s1 + $0x48] sm:$0xff]
    %v569 = vld [vmem:[%s1 + $0x50] sm:$0xff]
    %v570 = vld [vmem:[%s1 + $0x58] sm:$0xff]
    %v571 = vpack.c.bf16 %v565, %v559
    %v572 = vpack.c.bf16 %v566, %v560
    %v573 = vpack.c.bf16 %v567, %v561
    %v574 = vpack.c.bf16 %v568, %v562
    %v575 = vpack.c.bf16 %v569, %v563
    %v576 = vpack.c.bf16 %v570, %v564
    %s577 = scalar_lea.vmem %s4, 384
    %v578 = vld [vmem:[%s577] sm:$0xf]
    %v579 = vld [vmem:[%s577 + $0x4] sm:$0xf]
    %v580 = vld [vmem:[%s577 + $0x8] sm:$0xf]
    %v581 = vld [vmem:[%s577 + $0xc] sm:$0xf]
    %v582 = vld [vmem:[%s577 + $0x10] sm:$0xf]
    %v583 = vld [vmem:[%s577 + $0x14] sm:$0xf]
    %v584 = vld [vmem:[%s577 + $0x18] sm:$0xf]
    %v585 = vld [vmem:[%s577 + $0x1c] sm:$0xf]
    %v586 = vld [vmem:[%s577 + $0x20] sm:$0xf]
    %v587 = vld [vmem:[%s577 + $0x24] sm:$0xf]
    %v588 = vld [vmem:[%s577 + $0x28] sm:$0xf]
    %v589 = vld [vmem:[%s577 + $0x2c] sm:$0xf]
    %v590 = vld [vmem:[%s577 + $0x30] sm:$0xf]
    %v591 = vld [vmem:[%s577 + $0x34] sm:$0xf]
    %v592 = vld [vmem:[%s577 + $0x38] sm:$0xf]
    %v593 = vld [vmem:[%s577 + $0x3c] sm:$0xf]
    %v594 = vld [vmem:[%s577 + $0x40] sm:$0xf]
    %v595 = vld [vmem:[%s577 + $0x44] sm:$0xf]
    %v596 = vld [vmem:[%s577 + $0x48] sm:$0xf]
    %v597 = vld [vmem:[%s577 + $0x4c] sm:$0xf]
    %v598 = vld [vmem:[%s577 + $0x50] sm:$0xf]
    %v599 = vld [vmem:[%s577 + $0x54] sm:$0xf]
    %v600 = vld [vmem:[%s577 + $0x58] sm:$0xf]
    %v601 = vld [vmem:[%s577 + $0x5c] sm:$0xf]
    %v602 = vld [vmem:[%s577 + $0x60] sm:$0xf]
    %v603 = vld [vmem:[%s577 + $0x64] sm:$0xf]
    %v604 = vld [vmem:[%s577 + $0x68] sm:$0xf]
    %v605 = vld [vmem:[%s577 + $0x6c] sm:$0xf]
    %v606 = vld [vmem:[%s577 + $0x70] sm:$0xf]
    %v607 = vld [vmem:[%s577 + $0x74] sm:$0xf]
    %v608 = vld [vmem:[%s577 + $0x78] sm:$0xf]
    %v609 = vld [vmem:[%s577 + $0x7c] sm:$0xf]
    %v610 = vld [vmem:[%s577 + $0x80] sm:$0xf]
    %v611 = vld [vmem:[%s577 + $0x84] sm:$0xf]
    %v612 = vld [vmem:[%s577 + $0x88] sm:$0xf]
    %v613 = vld [vmem:[%s577 + $0x8c] sm:$0xf]
    %v614 = vld [vmem:[%s577 + $0x90] sm:$0xf]
    %v615 = vld [vmem:[%s577 + $0x94] sm:$0xf]
    %v616 = vld [vmem:[%s577 + $0x98] sm:$0xf]
    %v617 = vld [vmem:[%s577 + $0x9c] sm:$0xf]
    %v618 = vld [vmem:[%s577 + $0xa0] sm:$0xf]
    %v619 = vld [vmem:[%s577 + $0xa4] sm:$0xf]
    %v620 = vld [vmem:[%s577 + $0xa8] sm:$0xf]
    %v621 = vld [vmem:[%s577 + $0xac] sm:$0xf]
    %v622 = vld [vmem:[%s577 + $0xb0] sm:$0xf]
    %v623 = vld [vmem:[%s577 + $0xb4] sm:$0xf]
    %v624 = vld [vmem:[%s577 + $0xb8] sm:$0xf]
    %v625 = vld [vmem:[%s577 + $0xbc] sm:$0xf]
    %v626 = vld [vmem:[%s577 + $0xc0] sm:$0xf]
    %v627 = vld [vmem:[%s577 + $0xc4] sm:$0xf]
    %v628 = vld [vmem:[%s577 + $0xc8] sm:$0xf]
    %v629 = vld [vmem:[%s577 + $0xcc] sm:$0xf]
    %v630 = vld [vmem:[%s577 + $0xd0] sm:$0xf]
    %v631 = vld [vmem:[%s577 + $0xd4] sm:$0xf]
    %v632 = vld [vmem:[%s577 + $0xd8] sm:$0xf]
    %v633 = vld [vmem:[%s577 + $0xdc] sm:$0xf]
    %v634 = vld [vmem:[%s577 + $0xe0] sm:$0xf]
    %v635 = vld [vmem:[%s577 + $0xe4] sm:$0xf]
    %v636 = vld [vmem:[%s577 + $0xe8] sm:$0xf]
    %v637 = vld [vmem:[%s577 + $0xec] sm:$0xf]
    %v638 = vld [vmem:[%s577 + $0xf0] sm:$0xf]
    %v639 = vld [vmem:[%s577 + $0xf4] sm:$0xf]
    %v640 = vld [vmem:[%s577 + $0xf8] sm:$0xf]
    %v641 = vld [vmem:[%s577 + $0xfc] sm:$0xf]
    %v642 = vld [vmem:[%s577 + $0x100] sm:$0xf]
    %v643 = vld [vmem:[%s577 + $0x104] sm:$0xf]
    %v644 = vld [vmem:[%s577 + $0x108] sm:$0xf]
    %v645 = vld [vmem:[%s577 + $0x10c] sm:$0xf]
    %v646 = vld [vmem:[%s577 + $0x110] sm:$0xf]
    %v647 = vld [vmem:[%s577 + $0x114] sm:$0xf]
    %v648 = vld [vmem:[%s577 + $0x118] sm:$0xf]
    %v649 = vld [vmem:[%s577 + $0x11c] sm:$0xf]
    %v650 = vld [vmem:[%s577 + $0x120] sm:$0xf]
    %v651 = vld [vmem:[%s577 + $0x124] sm:$0xf]
    %v652 = vld [vmem:[%s577 + $0x128] sm:$0xf]
    %v653 = vld [vmem:[%s577 + $0x12c] sm:$0xf]
    %v654 = vld [vmem:[%s577 + $0x130] sm:$0xf]
    %v655 = vld [vmem:[%s577 + $0x134] sm:$0xf]
    %v656 = vld [vmem:[%s577 + $0x138] sm:$0xf]
    %v657 = vld [vmem:[%s577 + $0x13c] sm:$0xf]
    %v658 = vld [vmem:[%s577 + $0x140] sm:$0xf]
    %v659 = vld [vmem:[%s577 + $0x144] sm:$0xf]
    %v660 = vld [vmem:[%s577 + $0x148] sm:$0xf]
    %v661 = vld [vmem:[%s577 + $0x14c] sm:$0xf]
    %v662 = vld [vmem:[%s577 + $0x150] sm:$0xf]
    %v663 = vld [vmem:[%s577 + $0x154] sm:$0xf]
    %v664 = vld [vmem:[%s577 + $0x158] sm:$0xf]
    %v665 = vld [vmem:[%s577 + $0x15c] sm:$0xf]
    %v666 = vld [vmem:[%s577 + $0x160] sm:$0xf]
    %v667 = vld [vmem:[%s577 + $0x164] sm:$0xf]
    %v668 = vld [vmem:[%s577 + $0x168] sm:$0xf]
    %v669 = vld [vmem:[%s577 + $0x16c] sm:$0xf]
    %v670 = vld [vmem:[%s577 + $0x170] sm:$0xf]
    %v671 = vld [vmem:[%s577 + $0x174] sm:$0xf]
    %v672 = vld [vmem:[%s577 + $0x178] sm:$0xf]
    %v673 = vld [vmem:[%s577 + $0x17c] sm:$0xf]
    %v770 = vunpack.c.l.b16 %v578
    %v771 = vunpack.c.l.b16 %v579
    %v772 = vunpack.c.l.b16 %v580
    %v773 = vunpack.c.l.b16 %v581
    %v774 = vunpack.c.l.b16 %v582
    %v775 = vunpack.c.l.b16 %v583
    %v776 = vunpack.c.l.b16 %v584
    %v777 = vunpack.c.l.b16 %v585
    %v778 = vunpack.c.l.b16 %v586
    %v779 = vunpack.c.l.b16 %v587
    %v780 = vunpack.c.l.b16 %v588
    %v781 = vunpack.c.l.b16 %v589
    %v782 = vunpack.c.l.b16 %v590
    %v783 = vunpack.c.l.b16 %v591
    %v784 = vunpack.c.l.b16 %v592
    %v785 = vunpack.c.l.b16 %v593
    %v786 = vunpack.c.l.b16 %v594
    %v787 = vunpack.c.l.b16 %v595
    %v788 = vunpack.c.l.b16 %v596
    %v789 = vunpack.c.l.b16 %v597
    %v790 = vunpack.c.l.b16 %v598
    %v791 = vunpack.c.l.b16 %v599
    %v792 = vunpack.c.l.b16 %v600
    %v793 = vunpack.c.l.b16 %v601
    %v794 = vunpack.c.l.b16 %v602
    %v795 = vunpack.c.l.b16 %v603
    %v796 = vunpack.c.l.b16 %v604
    %v797 = vunpack.c.l.b16 %v605
    %v798 = vunpack.c.l.b16 %v606
    %v799 = vunpack.c.l.b16 %v607
    %v800 = vunpack.c.l.b16 %v608
    %v801 = vunpack.c.l.b16 %v609
    %v802 = vunpack.c.l.b16 %v610
    %v803 = vunpack.c.l.b16 %v611
    %v804 = vunpack.c.l.b16 %v612
    %v805 = vunpack.c.l.b16 %v613
    %v806 = vunpack.c.l.b16 %v614
    %v807 = vunpack.c.l.b16 %v615
    %v808 = vunpack.c.l.b16 %v616
    %v809 = vunpack.c.l.b16 %v617
    %v810 = vunpack.c.l.b16 %v618
    %v811 = vunpack.c.l.b16 %v619
    %v812 = vunpack.c.l.b16 %v620
    %v813 = vunpack.c.l.b16 %v621
    %v814 = vunpack.c.l.b16 %v622
    %v815 = vunpack.c.l.b16 %v623
    %v816 = vunpack.c.l.b16 %v624
    %v817 = vunpack.c.l.b16 %v625
    %v818 = vunpack.c.l.b16 %v626
    %v819 = vunpack.c.l.b16 %v627
    %v820 = vunpack.c.l.b16 %v628
    %v821 = vunpack.c.l.b16 %v629
    %v822 = vunpack.c.l.b16 %v630
    %v823 = vunpack.c.l.b16 %v631
    %v824 = vunpack.c.l.b16 %v632
    %v825 = vunpack.c.l.b16 %v633
    %v826 = vunpack.c.l.b16 %v634
    %v827 = vunpack.c.l.b16 %v635
    %v828 = vunpack.c.l.b16 %v636
    %v829 = vunpack.c.l.b16 %v637
    %v830 = vunpack.c.l.b16 %v638
    %v831 = vunpack.c.l.b16 %v639
    %v832 = vunpack.c.l.b16 %v640
    %v833 = vunpack.c.l.b16 %v641
    %v834 = vunpack.c.l.b16 %v642
    %v835 = vunpack.c.l.b16 %v643
    %v836 = vunpack.c.l.b16 %v644
    %v837 = vunpack.c.l.b16 %v645
    %v838 = vunpack.c.l.b16 %v646
    %v839 = vunpack.c.l.b16 %v647
    %v840 = vunpack.c.l.b16 %v648
    %v841 = vunpack.c.l.b16 %v649
    %v842 = vunpack.c.l.b16 %v650
    %v843 = vunpack.c.l.b16 %v651
    %v844 = vunpack.c.l.b16 %v652
    %v845 = vunpack.c.l.b16 %v653
    %v846 = vunpack.c.l.b16 %v654
    %v847 = vunpack.c.l.b16 %v655
    %v848 = vunpack.c.l.b16 %v656
    %v849 = vunpack.c.l.b16 %v657
    %v850 = vunpack.c.l.b16 %v658
    %v851 = vunpack.c.l.b16 %v659
    %v852 = vunpack.c.l.b16 %v660
    %v853 = vunpack.c.l.b16 %v661
    %v854 = vunpack.c.l.b16 %v662
    %v855 = vunpack.c.l.b16 %v663
    %v856 = vunpack.c.l.b16 %v664
    %v857 = vunpack.c.l.b16 %v665
    %v858 = vunpack.c.l.b16 %v666
    %v859 = vunpack.c.l.b16 %v667
    %v860 = vunpack.c.l.b16 %v668
    %v861 = vunpack.c.l.b16 %v669
    %v862 = vunpack.c.l.b16 %v670
    %v863 = vunpack.c.l.b16 %v671
    %v864 = vunpack.c.l.b16 %v672
    %v865 = vunpack.c.l.b16 %v673
    %v866 = vpack.c.b16 %v771, %v770
    %v867 = vpack.c.b16 %v773, %v772
    %v868 = vpack.c.b16 %v775, %v774
    %v869 = vpack.c.b16 %v777, %v776
    %v870 = vpack.c.b16 %v779, %v778
    %v871 = vpack.c.b16 %v781, %v780
    %v872 = vpack.c.b16 %v783, %v782
    %v873 = vpack.c.b16 %v785, %v784
    %v874 = vpack.c.b16 %v787, %v786
    %v875 = vpack.c.b16 %v789, %v788
    %v876 = vpack.c.b16 %v791, %v790
    %v877 = vpack.c.b16 %v793, %v792
    %v878 = vpack.c.b16 %v795, %v794
    %v879 = vpack.c.b16 %v797, %v796
    %v880 = vpack.c.b16 %v799, %v798
    %v881 = vpack.c.b16 %v801, %v800
    %v882 = vpack.c.b16 %v803, %v802
    %v883 = vpack.c.b16 %v805, %v804
    %v884 = vpack.c.b16 %v807, %v806
    %v885 = vpack.c.b16 %v809, %v808
    %v886 = vpack.c.b16 %v811, %v810
    %v887 = vpack.c.b16 %v813, %v812
    %v888 = vpack.c.b16 %v815, %v814
    %v889 = vpack.c.b16 %v817, %v816
    %v890 = vpack.c.b16 %v819, %v818
    %v891 = vpack.c.b16 %v821, %v820
    %v892 = vpack.c.b16 %v823, %v822
    %v893 = vpack.c.b16 %v825, %v824
    %v894 = vpack.c.b16 %v827, %v826
    %v895 = vpack.c.b16 %v829, %v828
    %v896 = vpack.c.b16 %v831, %v830
    %v897 = vpack.c.b16 %v833, %v832
    %v898 = vpack.c.b16 %v835, %v834
    %v899 = vpack.c.b16 %v837, %v836
    %v900 = vpack.c.b16 %v839, %v838
    %v901 = vpack.c.b16 %v841, %v840
    %v902 = vpack.c.b16 %v843, %v842
    %v903 = vpack.c.b16 %v845, %v844
    %v904 = vpack.c.b16 %v847, %v846
    %v905 = vpack.c.b16 %v849, %v848
    %v906 = vpack.c.b16 %v851, %v850
    %v907 = vpack.c.b16 %v853, %v852
    %v908 = vpack.c.b16 %v855, %v854
    %v909 = vpack.c.b16 %v857, %v856
    %v910 = vpack.c.b16 %v859, %v858
    %v911 = vpack.c.b16 %v861, %v860
    %v912 = vpack.c.b16 %v863, %v862
    %v913 = vpack.c.b16 %v865, %v864
    %962 = vmatprep.subr.bf16.mxu0 0
    %963 = vmatpush1.bf16.msra.mxu0 %v866
    %964 = vmatprep.subr.bf16.mxu0 0
    %965 = vmatpush1.bf16.msra.mxu0 %v867
    %966 = vmatprep.subr.bf16.mxu0 0
    %967 = vmatpush1.bf16.msra.mxu0 %v868
    %968 = vmatprep.subr.bf16.mxu0 0
    %969 = vmatpush1.bf16.msra.mxu0 %v869
    %970 = vmatprep.subr.bf16.mxu0 0
    %971 = vmatpush1.bf16.msra.mxu0 %v870
    %972 = vmatprep.subr.bf16.mxu0 0
    %973 = vmatpush1.bf16.msra.mxu0 %v871
    %974 = vmatprep.subr.bf16.mxu0 0
    %975 = vmatpush1.bf16.msra.mxu0 %v872
    %976 = vmatprep.subr.bf16.mxu0 0
    %977 = vmatpush1.bf16.msra.mxu0 %v873
    %978 = vmatprep.subr.bf16.mxu0 0
    %979 = vmatpush1.bf16.msra.mxu0 %v874
    %980 = vmatprep.subr.bf16.mxu0 0
    %981 = vmatpush1.bf16.msra.mxu0 %v875
    %982 = vmatprep.subr.bf16.mxu0 0
    %983 = vmatpush1.bf16.msra.mxu0 %v876
    %984 = vmatprep.subr.bf16.mxu0 0
    %985 = vmatpush1.bf16.msra.mxu0 %v877
    %986 = vmatprep.subr.bf16.mxu0 0
    %987 = vmatpush1.bf16.msra.mxu0 %v878
    %988 = vmatprep.subr.bf16.mxu0 0
    %989 = vmatpush1.bf16.msra.mxu0 %v879
    %990 = vmatprep.subr.bf16.mxu0 0
    %991 = vmatpush1.bf16.msra.mxu0 %v880
    %992 = vmatprep.subr.bf16.mxu0 0
    %993 = vmatpush1.bf16.msra.mxu0 %v881
    %994 = vmatprep.mubr.bf16.mxu0 %v572
    %995 = vmatmul.mubr.bf16.gmra.mrb[0].mxu0 %v571
    %v996 = vpop.f32.mrb[0].mxu0
    %v997 = vadd.f32 0.0, %v996
    %v998 = vpop.f32.mrb[0].mxu0
    %v999 = vpop.f32.mrb[0].mxu0
    %v1000 = vadd.f32 0.0, %v999
    %v1001 = vpop.f32.mrb[0].mxu0
    %1002 = vdwg.mxu0
    %1003 = vmatprep.subr.bf16.mxu0 0
    %1004 = vmatpush1.bf16.msra.mxu0 %v882
    %1005 = vmatprep.subr.bf16.mxu0 0
    %1006 = vmatpush1.bf16.msra.mxu0 %v883
    %1007 = vmatprep.subr.bf16.mxu0 0
    %1008 = vmatpush1.bf16.msra.mxu0 %v884
    %1009 = vmatprep.subr.bf16.mxu0 0
    %1010 = vmatpush1.bf16.msra.mxu0 %v885
    %1011 = vmatprep.subr.bf16.mxu0 0
    %1012 = vmatpush1.bf16.msra.mxu0 %v886
    %1013 = vmatprep.subr.bf16.mxu0 0
    %1014 = vmatpush1.bf16.msra.mxu0 %v887
    %1015 = vmatprep.subr.bf16.mxu0 0
    %1016 = vmatpush1.bf16.msra.mxu0 %v888
    %1017 = vmatprep.subr.bf16.mxu0 0
    %1018 = vmatpush1.bf16.msra.mxu0 %v889
    %1019 = vmatprep.subr.bf16.mxu0 0
    %1020 = vmatpush1.bf16.msra.mxu0 %v890
    %1021 = vmatprep.subr.bf16.mxu0 0
    %1022 = vmatpush1.bf16.msra.mxu0 %v891
    %1023 = vmatprep.subr.bf16.mxu0 0
    %1024 = vmatpush1.bf16.msra.mxu0 %v892
    %1025 = vmatprep.subr.bf16.mxu0 0
    %1026 = vmatpush1.bf16.msra.mxu0 %v893
    %1027 = vmatprep.subr.bf16.mxu0 0
    %1028 = vmatpush1.bf16.msra.mxu0 %v894
    %1029 = vmatprep.subr.bf16.mxu0 0
    %1030 = vmatpush1.bf16.msra.mxu0 %v895
    %1031 = vmatprep.subr.bf16.mxu0 0
    %1032 = vmatpush1.bf16.msra.mxu0 %v896
    %1033 = vmatprep.subr.bf16.mxu0 0
    %1034 = vmatpush1.bf16.msra.mxu0 %v897
    %1035 = vmatprep.mubr.bf16.mxu0 %v574
    %1036 = vmatmul.mubr.bf16.gmra.mrb[0].mxu0 %v573
    %v1037 = vpop.f32.mrb[0].mxu0
    %v1038 = vadd.f32 %v997, %v1037
    %v1039 = vpop.f32.mrb[0].mxu0
    %v1040 = vpop.f32.mrb[0].mxu0
    %v1041 = vadd.f32 %v1000, %v1040
    %v1042 = vpop.f32.mrb[0].mxu0
    %1043 = vdwg.mxu0
    %1044 = vmatprep.subr.bf16.mxu0 0
    %1045 = vmatpush1.bf16.msra.mxu0 %v898
    %1046 = vmatprep.subr.bf16.mxu0 0
    %1047 = vmatpush1.bf16.msra.mxu0 %v899
    %1048 = vmatprep.subr.bf16.mxu0 0
    %1049 = vmatpush1.bf16.msra.mxu0 %v900
    %1050 = vmatprep.subr.bf16.mxu0 0
    %1051 = vmatpush1.bf16.msra.mxu0 %v901
    %1052 = vmatprep.subr.bf16.mxu0 0
    %1053 = vmatpush1.bf16.msra.mxu0 %v902
    %1054 = vmatprep.subr.bf16.mxu0 0
    %1055 = vmatpush1.bf16.msra.mxu0 %v903
    %1056 = vmatprep.subr.bf16.mxu0 0
    %1057 = vmatpush1.bf16.msra.mxu0 %v904
    %1058 = vmatprep.subr.bf16.mxu0 0
    %1059 = vmatpush1.bf16.msra.mxu0 %v905
    %1060 = vmatprep.subr.bf16.mxu0 0
    %1061 = vmatpush1.bf16.msra.mxu0 %v906
    %1062 = vmatprep.subr.bf16.mxu0 0
    %1063 = vmatpush1.bf16.msra.mxu0 %v907
    %1064 = vmatprep.subr.bf16.mxu0 0
    %1065 = vmatpush1.bf16.msra.mxu0 %v908
    %1066 = vmatprep.subr.bf16.mxu0 0
    %1067 = vmatpush1.bf16.msra.mxu0 %v909
    %1068 = vmatprep.subr.bf16.mxu0 0
    %1069 = vmatpush1.bf16.msra.mxu0 %v910
    %1070 = vmatprep.subr.bf16.mxu0 0
    %1071 = vmatpush1.bf16.msra.mxu0 %v911
    %1072 = vmatprep.subr.bf16.mxu0 0
    %1073 = vmatpush1.bf16.msra.mxu0 %v912
    %1074 = vmatprep.subr.bf16.mxu0 0
    %1075 = vmatpush1.bf16.msra.mxu0 %v913
    %1076 = vmatprep.mubr.bf16.mxu0 %v576
    %1077 = vmatmul.mubr.bf16.gmra.mrb[0].mxu0 %v575
    %v1078 = vpop.f32.mrb[0].mxu0
    %v1079 = vadd.f32 %v1038, %v1078
    %v1080 = vpop.f32.mrb[0].mxu0
    %v1081 = vpop.f32.mrb[0].mxu0
    %v1082 = vadd.f32 %v1041, %v1081
    %v1083 = vpop.f32.mrb[0].mxu0
    %1084 = vdwg.mxu0
    %v1085 = vld [vmem:[%s2] sm:$0xff]
    %v1086 = vld [vmem:[%s2 + $0x8] sm:$0xff]
    %v1087 = vld [vmem:[%s2 + $0x10] sm:$0xff]
    %v1088 = vld [vmem:[%s2 + $0x18] sm:$0xff]
    %v1089 = vld [vmem:[%s2 + $0x20] sm:$0xff]
    %v1090 = vld [vmem:[%s2 + $0x28] sm:$0xff]
    %v1091 = vld [vmem:[%s2 + $0x30] sm:$0xff]
    %v1092 = vld [vmem:[%s2 + $0x38] sm:$0xff]
    %v1093 = vld [vmem:[%s2 + $0x40] sm:$0xff]
    %v1094 = vld [vmem:[%s2 + $0x48] sm:$0xff]
    %v1095 = vld [vmem:[%s2 + $0x50] sm:$0xff]
    %v1096 = vld [vmem:[%s2 + $0x58] sm:$0xff]
    %v1097 = vpack.c.bf16 %v1091, %v1085
    %v1098 = vpack.c.bf16 %v1092, %v1086
    %v1099 = vpack.c.bf16 %v1093, %v1087
    %v1100 = vpack.c.bf16 %v1094, %v1088
    %v1101 = vpack.c.bf16 %v1095, %v1089
    %v1102 = vpack.c.bf16 %v1096, %v1090
    %s1103 = scalar_lea.vmem %s4, 768
    %v1104 = vld [vmem:[%s1103] sm:$0xf]
    %v1105 = vld [vmem:[%s1103 + $0x4] sm:$0xf]
    %v1106 = vld [vmem:[%s1103 + $0x8] sm:$0xf]
    %v1107 = vld [vmem:[%s1103 + $0xc] sm:$0xf]
    %v1108 = vld [vmem:[%s1103 + $0x10] sm:$0xf]
    %v1109 = vld [vmem:[%s1103 + $0x14] sm:$0xf]
    %v1110 = vld [vmem:[%s1103 + $0x18] sm:$0xf]
    %v1111 = vld [vmem:[%s1103 + $0x1c] sm:$0xf]
    %v1112 = vld [vmem:[%s1103 + $0x20] sm:$0xf]
    %v1113 = vld [vmem:[%s1103 + $0x24] sm:$0xf]
    %v1114 = vld [vmem:[%s1103 + $0x28] sm:$0xf]
    %v1115 = vld [vmem:[%s1103 + $0x2c] sm:$0xf]
    %v1116 = vld [vmem:[%s1103 + $0x30] sm:$0xf]
    %v1117 = vld [vmem:[%s1103 + $0x34] sm:$0xf]
    %v1118 = vld [vmem:[%s1103 + $0x38] sm:$0xf]
    %v1119 = vld [vmem:[%s1103 + $0x3c] sm:$0xf]
    %v1120 = vld [vmem:[%s1103 + $0x40] sm:$0xf]
    %v1121 = vld [vmem:[%s1103 + $0x44] sm:$0xf]
    %v1122 = vld [vmem:[%s1103 + $0x48] sm:$0xf]
    %v1123 = vld [vmem:[%s1103 + $0x4c] sm:$0xf]
    %v1124 = vld [vmem:[%s1103 + $0x50] sm:$0xf]
    %v1125 = vld [vmem:[%s1103 + $0x54] sm:$0xf]
    %v1126 = vld [vmem:[%s1103 + $0x58] sm:$0xf]
    %v1127 = vld [vmem:[%s1103 + $0x5c] sm:$0xf]
    %v1128 = vld [vmem:[%s1103 + $0x60] sm:$0xf]
    %v1129 = vld [vmem:[%s1103 + $0x64] sm:$0xf]
    %v1130 = vld [vmem:[%s1103 + $0x68] sm:$0xf]
    %v1131 = vld [vmem:[%s1103 + $0x6c] sm:$0xf]
    %v1132 = vld [vmem:[%s1103 + $0x70] sm:$0xf]
    %v1133 = vld [vmem:[%s1103 + $0x74] sm:$0xf]
    %v1134 = vld [vmem:[%s1103 + $0x78] sm:$0xf]
    %v1135 = vld [vmem:[%s1103 + $0x7c] sm:$0xf]
    %v1136 = vld [vmem:[%s1103 + $0x80] sm:$0xf]
    %v1137 = vld [vmem:[%s1103 + $0x84] sm:$0xf]
    %v1138 = vld [vmem:[%s1103 + $0x88] sm:$0xf]
    %v1139 = vld [vmem:[%s1103 + $0x8c] sm:$0xf]
    %v1140 = vld [vmem:[%s1103 + $0x90] sm:$0xf]
    %v1141 = vld [vmem:[%s1103 + $0x94] sm:$0xf]
    %v1142 = vld [vmem:[%s1103 + $0x98] sm:$0xf]
    %v1143 = vld [vmem:[%s1103 + $0x9c] sm:$0xf]
    %v1144 = vld [vmem:[%s1103 + $0xa0] sm:$0xf]
    %v1145 = vld [vmem:[%s1103 + $0xa4] sm:$0xf]
    %v1146 = vld [vmem:[%s1103 + $0xa8] sm:$0xf]
    %v1147 = vld [vmem:[%s1103 + $0xac] sm:$0xf]
    %v1148 = vld [vmem:[%s1103 + $0xb0] sm:$0xf]
    %v1149 = vld [vmem:[%s1103 + $0xb4] sm:$0xf]
    %v1150 = vld [vmem:[%s1103 + $0xb8] sm:$0xf]
    %v1151 = vld [vmem:[%s1103 + $0xbc] sm:$0xf]
    %v1152 = vld [vmem:[%s1103 + $0xc0] sm:$0xf]
    %v1153 = vld [vmem:[%s1103 + $0xc4] sm:$0xf]
    %v1154 = vld [vmem:[%s1103 + $0xc8] sm:$0xf]
    %v1155 = vld [vmem:[%s1103 + $0xcc] sm:$0xf]
    %v1156 = vld [vmem:[%s1103 + $0xd0] sm:$0xf]
    %v1157 = vld [vmem:[%s1103 + $0xd4] sm:$0xf]
    %v1158 = vld [vmem:[%s1103 + $0xd8] sm:$0xf]
    %v1159 = vld [vmem:[%s1103 + $0xdc] sm:$0xf]
    %v1160 = vld [vmem:[%s1103 + $0xe0] sm:$0xf]
    %v1161 = vld [vmem:[%s1103 + $0xe4] sm:$0xf]
    %v1162 = vld [vmem:[%s1103 + $0xe8] sm:$0xf]
    %v1163 = vld [vmem:[%s1103 + $0xec] sm:$0xf]
    %v1164 = vld [vmem:[%s1103 + $0xf0] sm:$0xf]
    %v1165 = vld [vmem:[%s1103 + $0xf4] sm:$0xf]
    %v1166 = vld [vmem:[%s1103 + $0xf8] sm:$0xf]
    %v1167 = vld [vmem:[%s1103 + $0xfc] sm:$0xf]
    %v1168 = vld [vmem:[%s1103 + $0x100] sm:$0xf]
    %v1169 = vld [vmem:[%s1103 + $0x104] sm:$0xf]
    %v1170 = vld [vmem:[%s1103 + $0x108] sm:$0xf]
    %v1171 = vld [vmem:[%s1103 + $0x10c] sm:$0xf]
    %v1172 = vld [vmem:[%s1103 + $0x110] sm:$0xf]
    %v1173 = vld [vmem:[%s1103 + $0x114] sm:$0xf]
    %v1174 = vld [vmem:[%s1103 + $0x118] sm:$0xf]
    %v1175 = vld [vmem:[%s1103 + $0x11c] sm:$0xf]
    %v1176 = vld [vmem:[%s1103 + $0x120] sm:$0xf]
    %v1177 = vld [vmem:[%s1103 + $0x124] sm:$0xf]
    %v1178 = vld [vmem:[%s1103 + $0x128] sm:$0xf]
    %v1179 = vld [vmem:[%s1103 + $0x12c] sm:$0xf]
    %v1180 = vld [vmem:[%s1103 + $0x130] sm:$0xf]
    %v1181 = vld [vmem:[%s1103 + $0x134] sm:$0xf]
    %v1182 = vld [vmem:[%s1103 + $0x138] sm:$0xf]
    %v1183 = vld [vmem:[%s1103 + $0x13c] sm:$0xf]
    %v1184 = vld [vmem:[%s1103 + $0x140] sm:$0xf]
    %v1185 = vld [vmem:[%s1103 + $0x144] sm:$0xf]
    %v1186 = vld [vmem:[%s1103 + $0x148] sm:$0xf]
    %v1187 = vld [vmem:[%s1103 + $0x14c] sm:$0xf]
    %v1188 = vld [vmem:[%s1103 + $0x150] sm:$0xf]
    %v1189 = vld [vmem:[%s1103 + $0x154] sm:$0xf]
    %v1190 = vld [vmem:[%s1103 + $0x158] sm:$0xf]
    %v1191 = vld [vmem:[%s1103 + $0x15c] sm:$0xf]
    %v1192 = vld [vmem:[%s1103 + $0x160] sm:$0xf]
    %v1193 = vld [vmem:[%s1103 + $0x164] sm:$0xf]
    %v1194 = vld [vmem:[%s1103 + $0x168] sm:$0xf]
    %v1195 = vld [vmem:[%s1103 + $0x16c] sm:$0xf]
    %v1196 = vld [vmem:[%s1103 + $0x170] sm:$0xf]
    %v1197 = vld [vmem:[%s1103 + $0x174] sm:$0xf]
    %v1198 = vld [vmem:[%s1103 + $0x178] sm:$0xf]
    %v1199 = vld [vmem:[%s1103 + $0x17c] sm:$0xf]
    %v1296 = vunpack.c.l.b16 %v1104
    %v1297 = vunpack.c.l.b16 %v1105
    %v1298 = vunpack.c.l.b16 %v1106
    %v1299 = vunpack.c.l.b16 %v1107
    %v1300 = vunpack.c.l.b16 %v1108
    %v1301 = vunpack.c.l.b16 %v1109
    %v1302 = vunpack.c.l.b16 %v1110
    %v1303 = vunpack.c.l.b16 %v1111
    %v1304 = vunpack.c.l.b16 %v1112
    %v1305 = vunpack.c.l.b16 %v1113
    %v1306 = vunpack.c.l.b16 %v1114
    %v1307 = vunpack.c.l.b16 %v1115
    %v1308 = vunpack.c.l.b16 %v1116
    %v1309 = vunpack.c.l.b16 %v1117
    %v1310 = vunpack.c.l.b16 %v1118
    %v1311 = vunpack.c.l.b16 %v1119
    %v1312 = vunpack.c.l.b16 %v1120
    %v1313 = vunpack.c.l.b16 %v1121
    %v1314 = vunpack.c.l.b16 %v1122
    %v1315 = vunpack.c.l.b16 %v1123
    %v1316 = vunpack.c.l.b16 %v1124
    %v1317 = vunpack.c.l.b16 %v1125
    %v1318 = vunpack.c.l.b16 %v1126
    %v1319 = vunpack.c.l.b16 %v1127
    %v1320 = vunpack.c.l.b16 %v1128
    %v1321 = vunpack.c.l.b16 %v1129
    %v1322 = vunpack.c.l.b16 %v1130
    %v1323 = vunpack.c.l.b16 %v1131
    %v1324 = vunpack.c.l.b16 %v1132
    %v1325 = vunpack.c.l.b16 %v1133
    %v1326 = vunpack.c.l.b16 %v1134
    %v1327 = vunpack.c.l.b16 %v1135
    %v1328 = vunpack.c.l.b16 %v1136
    %v1329 = vunpack.c.l.b16 %v1137
    %v1330 = vunpack.c.l.b16 %v1138
    %v1331 = vunpack.c.l.b16 %v1139
    %v1332 = vunpack.c.l.b16 %v1140
    %v1333 = vunpack.c.l.b16 %v1141
    %v1334 = vunpack.c.l.b16 %v1142
    %v1335 = vunpack.c.l.b16 %v1143
    %v1336 = vunpack.c.l.b16 %v1144
    %v1337 = vunpack.c.l.b16 %v1145
    %v1338 = vunpack.c.l.b16 %v1146
    %v1339 = vunpack.c.l.b16 %v1147
    %v1340 = vunpack.c.l.b16 %v1148
    %v1341 = vunpack.c.l.b16 %v1149
    %v1342 = vunpack.c.l.b16 %v1150
    %v1343 = vunpack.c.l.b16 %v1151
    %v1344 = vunpack.c.l.b16 %v1152
    %v1345 = vunpack.c.l.b16 %v1153
    %v1346 = vunpack.c.l.b16 %v1154
    %v1347 = vunpack.c.l.b16 %v1155
    %v1348 = vunpack.c.l.b16 %v1156
    %v1349 = vunpack.c.l.b16 %v1157
    %v1350 = vunpack.c.l.b16 %v1158
    %v1351 = vunpack.c.l.b16 %v1159
    %v1352 = vunpack.c.l.b16 %v1160
    %v1353 = vunpack.c.l.b16 %v1161
    %v1354 = vunpack.c.l.b16 %v1162
    %v1355 = vunpack.c.l.b16 %v1163
    %v1356 = vunpack.c.l.b16 %v1164
    %v1357 = vunpack.c.l.b16 %v1165
    %v1358 = vunpack.c.l.b16 %v1166
    %v1359 = vunpack.c.l.b16 %v1167
    %v1360 = vunpack.c.l.b16 %v1168
    %v1361 = vunpack.c.l.b16 %v1169
    %v1362 = vunpack.c.l.b16 %v1170
    %v1363 = vunpack.c.l.b16 %v1171
    %v1364 = vunpack.c.l.b16 %v1172
    %v1365 = vunpack.c.l.b16 %v1173
    %v1366 = vunpack.c.l.b16 %v1174
    %v1367 = vunpack.c.l.b16 %v1175
    %v1368 = vunpack.c.l.b16 %v1176
    %v1369 = vunpack.c.l.b16 %v1177
    %v1370 = vunpack.c.l.b16 %v1178
    %v1371 = vunpack.c.l.b16 %v1179
    %v1372 = vunpack.c.l.b16 %v1180
    %v1373 = vunpack.c.l.b16 %v1181
    %v1374 = vunpack.c.l.b16 %v1182
    %v1375 = vunpack.c.l.b16 %v1183
    %v1376 = vunpack.c.l.b16 %v1184
    %v1377 = vunpack.c.l.b16 %v1185
    %v1378 = vunpack.c.l.b16 %v1186
    %v1379 = vunpack.c.l.b16 %v1187
    %v1380 = vunpack.c.l.b16 %v1188
    %v1381 = vunpack.c.l.b16 %v1189
    %v1382 = vunpack.c.l.b16 %v1190
    %v1383 = vunpack.c.l.b16 %v1191
    %v1384 = vunpack.c.l.b16 %v1192
    %v1385 = vunpack.c.l.b16 %v1193
    %v1386 = vunpack.c.l.b16 %v1194
    %v1387 = vunpack.c.l.b16 %v1195
    %v1388 = vunpack.c.l.b16 %v1196
    %v1389 = vunpack.c.l.b16 %v1197
    %v1390 = vunpack.c.l.b16 %v1198
    %v1391 = vunpack.c.l.b16 %v1199
    %v1392 = vpack.c.b16 %v1297, %v1296
    %v1393 = vpack.c.b16 %v1299, %v1298
    %v1394 = vpack.c.b16 %v1301, %v1300
    %v1395 = vpack.c.b16 %v1303, %v1302
    %v1396 = vpack.c.b16 %v1305, %v1304
    %v1397 = vpack.c.b16 %v1307, %v1306
    %v1398 = vpack.c.b16 %v1309, %v1308
    %v1399 = vpack.c.b16 %v1311, %v1310
    %v1400 = vpack.c.b16 %v1313, %v1312
    %v1401 = vpack.c.b16 %v1315, %v1314
    %v1402 = vpack.c.b16 %v1317, %v1316
    %v1403 = vpack.c.b16 %v1319, %v1318
    %v1404 = vpack.c.b16 %v1321, %v1320
    %v1405 = vpack.c.b16 %v1323, %v1322
    %v1406 = vpack.c.b16 %v1325, %v1324
    %v1407 = vpack.c.b16 %v1327, %v1326
    %v1408 = vpack.c.b16 %v1329, %v1328
    %v1409 = vpack.c.b16 %v1331, %v1330
    %v1410 = vpack.c.b16 %v1333, %v1332
    %v1411 = vpack.c.b16 %v1335, %v1334
    %v1412 = vpack.c.b16 %v1337, %v1336
    %v1413 = vpack.c.b16 %v1339, %v1338
    %v1414 = vpack.c.b16 %v1341, %v1340
    %v1415 = vpack.c.b16 %v1343, %v1342
    %v1416 = vpack.c.b16 %v1345, %v1344
    %v1417 = vpack.c.b16 %v1347, %v1346
    %v1418 = vpack.c.b16 %v1349, %v1348
    %v1419 = vpack.c.b16 %v1351, %v1350
    %v1420 = vpack.c.b16 %v1353, %v1352
    %v1421 = vpack.c.b16 %v1355, %v1354
    %v1422 = vpack.c.b16 %v1357, %v1356
    %v1423 = vpack.c.b16 %v1359, %v1358
    %v1424 = vpack.c.b16 %v1361, %v1360
    %v1425 = vpack.c.b16 %v1363, %v1362
    %v1426 = vpack.c.b16 %v1365, %v1364
    %v1427 = vpack.c.b16 %v1367, %v1366
    %v1428 = vpack.c.b16 %v1369, %v1368
    %v1429 = vpack.c.b16 %v1371, %v1370
    %v1430 = vpack.c.b16 %v1373, %v1372
    %v1431 = vpack.c.b16 %v1375, %v1374
    %v1432 = vpack.c.b16 %v1377, %v1376
    %v1433 = vpack.c.b16 %v1379, %v1378
    %v1434 = vpack.c.b16 %v1381, %v1380
    %v1435 = vpack.c.b16 %v1383, %v1382
    %v1436 = vpack.c.b16 %v1385, %v1384
    %v1437 = vpack.c.b16 %v1387, %v1386
    %v1438 = vpack.c.b16 %v1389, %v1388
    %v1439 = vpack.c.b16 %v1391, %v1390
    %1488 = vmatprep.subr.bf16.mxu0 0
    %1489 = vmatpush1.bf16.msra.mxu0 %v1392
    %1490 = vmatprep.subr.bf16.mxu0 0
    %1491 = vmatpush1.bf16.msra.mxu0 %v1393
    %1492 = vmatprep.subr.bf16.mxu0 0
    %1493 = vmatpush1.bf16.msra.mxu0 %v1394
    %1494 = vmatprep.subr.bf16.mxu0 0
    %1495 = vmatpush1.bf16.msra.mxu0 %v1395
    %1496 = vmatprep.subr.bf16.mxu0 0
    %1497 = vmatpush1.bf16.msra.mxu0 %v1396
    %1498 = vmatprep.subr.bf16.mxu0 0
    %1499 = vmatpush1.bf16.msra.mxu0 %v1397
    %1500 = vmatprep.subr.bf16.mxu0 0
    %1501 = vmatpush1.bf16.msra.mxu0 %v1398
    %1502 = vmatprep.subr.bf16.mxu0 0
    %1503 = vmatpush1.bf16.msra.mxu0 %v1399
    %1504 = vmatprep.subr.bf16.mxu0 0
    %1505 = vmatpush1.bf16.msra.mxu0 %v1400
    %1506 = vmatprep.subr.bf16.mxu0 0
    %1507 = vmatpush1.bf16.msra.mxu0 %v1401
    %1508 = vmatprep.subr.bf16.mxu0 0
    %1509 = vmatpush1.bf16.msra.mxu0 %v1402
    %1510 = vmatprep.subr.bf16.mxu0 0
    %1511 = vmatpush1.bf16.msra.mxu0 %v1403
    %1512 = vmatprep.subr.bf16.mxu0 0
    %1513 = vmatpush1.bf16.msra.mxu0 %v1404
    %1514 = vmatprep.subr.bf16.mxu0 0
    %1515 = vmatpush1.bf16.msra.mxu0 %v1405
    %1516 = vmatprep.subr.bf16.mxu0 0
    %1517 = vmatpush1.bf16.msra.mxu0 %v1406
    %1518 = vmatprep.subr.bf16.mxu0 0
    %1519 = vmatpush1.bf16.msra.mxu0 %v1407
    %1520 = vmatprep.mubr.bf16.mxu0 %v1098
    %1521 = vmatmul.mubr.bf16.gmra.mrb[0].mxu0 %v1097
    %v1522 = vpop.f32.mrb[0].mxu0
    %v1523 = vadd.f32 0.0, %v1522
    %v1524 = vpop.f32.mrb[0].mxu0
    %v1525 = vpop.f32.mrb[0].mxu0
    %v1526 = vadd.f32 0.0, %v1525
    %v1527 = vpop.f32.mrb[0].mxu0
    %1528 = vdwg.mxu0
    %1529 = vmatprep.subr.bf16.mxu0 0
    %1530 = vmatpush1.bf16.msra.mxu0 %v1408
    %1531 = vmatprep.subr.bf16.mxu0 0
    %1532 = vmatpush1.bf16.msra.mxu0 %v1409
    %1533 = vmatprep.subr.bf16.mxu0 0
    %1534 = vmatpush1.bf16.msra.mxu0 %v1410
    %1535 = vmatprep.subr.bf16.mxu0 0
    %1536 = vmatpush1.bf16.msra.mxu0 %v1411
    %1537 = vmatprep.subr.bf16.mxu0 0
    %1538 = vmatpush1.bf16.msra.mxu0 %v1412
    %1539 = vmatprep.subr.bf16.mxu0 0
    %1540 = vmatpush1.bf16.msra.mxu0 %v1413
    %1541 = vmatprep.subr.bf16.mxu0 0
    %1542 = vmatpush1.bf16.msra.mxu0 %v1414
    %1543 = vmatprep.subr.bf16.mxu0 0
    %1544 = vmatpush1.bf16.msra.mxu0 %v1415
    %1545 = vmatprep.subr.bf16.mxu0 0
    %1546 = vmatpush1.bf16.msra.mxu0 %v1416
    %1547 = vmatprep.subr.bf16.mxu0 0
    %1548 = vmatpush1.bf16.msra.mxu0 %v1417
    %1549 = vmatprep.subr.bf16.mxu0 0
    %1550 = vmatpush1.bf16.msra.mxu0 %v1418
    %1551 = vmatprep.subr.bf16.mxu0 0
    %1552 = vmatpush1.bf16.msra.mxu0 %v1419
    %1553 = vmatprep.subr.bf16.mxu0 0
    %1554 = vmatpush1.bf16.msra.mxu0 %v1420
    %1555 = vmatprep.subr.bf16.mxu0 0
    %1556 = vmatpush1.bf16.msra.mxu0 %v1421
    %1557 = vmatprep.subr.bf16.mxu0 0
    %1558 = vmatpush1.bf16.msra.mxu0 %v1422
    %1559 = vmatprep.subr.bf16.mxu0 0
    %1560 = vmatpush1.bf16.msra.mxu0 %v1423
    %1561 = vmatprep.mubr.bf16.mxu0 %v1100
    %1562 = vmatmul.mubr.bf16.gmra.mrb[0].mxu0 %v1099
    %v1563 = vpop.f32.mrb[0].mxu0
    %v1564 = vadd.f32 %v1523, %v1563
    %v1565 = vpop.f32.mrb[0].mxu0
    %v1566 = vpop.f32.mrb[0].mxu0
    %v1567 = vadd.f32 %v1526, %v1566
    %v1568 = vpop.f32.mrb[0].mxu0
    %1569 = vdwg.mxu0
    %1570 = vmatprep.subr.bf16.mxu0 0
    %1571 = vmatpush1.bf16.msra.mxu0 %v1424
    %1572 = vmatprep.subr.bf16.mxu0 0
    %1573 = vmatpush1.bf16.msra.mxu0 %v1425
    %1574 = vmatprep.subr.bf16.mxu0 0
    %1575 = vmatpush1.bf16.msra.mxu0 %v1426
    %1576 = vmatprep.subr.bf16.mxu0 0
    %1577 = vmatpush1.bf16.msra.mxu0 %v1427
    %1578 = vmatprep.subr.bf16.mxu0 0
    %1579 = vmatpush1.bf16.msra.mxu0 %v1428
    %1580 = vmatprep.subr.bf16.mxu0 0
    %1581 = vmatpush1.bf16.msra.mxu0 %v1429
    %1582 = vmatprep.subr.bf16.mxu0 0
    %1583 = vmatpush1.bf16.msra.mxu0 %v1430
    %1584 = vmatprep.subr.bf16.mxu0 0
    %1585 = vmatpush1.bf16.msra.mxu0 %v1431
    %1586 = vmatprep.subr.bf16.mxu0 0
    %1587 = vmatpush1.bf16.msra.mxu0 %v1432
    %1588 = vmatprep.subr.bf16.mxu0 0
    %1589 = vmatpush1.bf16.msra.mxu0 %v1433
    %1590 = vmatprep.subr.bf16.mxu0 0
    %1591 = vmatpush1.bf16.msra.mxu0 %v1434
    %1592 = vmatprep.subr.bf16.mxu0 0
    %1593 = vmatpush1.bf16.msra.mxu0 %v1435
    %1594 = vmatprep.subr.bf16.mxu0 0
    %1595 = vmatpush1.bf16.msra.mxu0 %v1436
    %1596 = vmatprep.subr.bf16.mxu0 0
    %1597 = vmatpush1.bf16.msra.mxu0 %v1437
    %1598 = vmatprep.subr.bf16.mxu0 0
    %1599 = vmatpush1.bf16.msra.mxu0 %v1438
    %1600 = vmatprep.subr.bf16.mxu0 0
    %1601 = vmatpush1.bf16.msra.mxu0 %v1439
    %1602 = vmatprep.mubr.bf16.mxu0 %v1102
    %1603 = vmatmul.mubr.bf16.gmra.mrb[0].mxu0 %v1101
    %v1604 = vpop.f32.mrb[0].mxu0
    %v1605 = vadd.f32 %v1564, %v1604
    %v1606 = vpop.f32.mrb[0].mxu0
    %v1607 = vpop.f32.mrb[0].mxu0
    %v1608 = vadd.f32 %v1567, %v1607
    %v1609 = vpop.f32.mrb[0].mxu0
    %1610 = vdwg.mxu0
    %v1611 = vld [vmem:[%s3] sm:$0xff]
    %v1612 = vld [vmem:[%s3 + $0x8] sm:$0xff]
    %v1613 = vpack.c.bf16 %v1612, %v1611
    %v1614 = vld [vmem:[%s5] sm:$0xf]
    %v1615 = vld [vmem:[%s5 + $0x4] sm:$0x3]
    %v1618 = vunpack.c.l.b16 %v1614
    %v1619 = vunpack.c.l.b16 %v1615
    %v1620 = vpack.c.b16 %v1619, %v1618
    %vm1621 = vcmask 97280
    %v1623 = vsel %vm1621, %v1613, 0
    %vm1625 = vcmask 1045504
    %v1627 = vsel %vm1625, %v1620, 0
    %1629 = vmatprep.subr.bf16.mxu0 0
    %1630 = vmatpush1.bf16.msra.mxu0 %v1627
    %1631 = vmatprep.subr.bf16.mxu0 0
    %1632 = vmatpush1.bf16.msra.mxu0 0
    %1633 = vmatprep.subr.bf16.mxu0 0
    %1634 = vmatpush1.bf16.msra.mxu0 0
    %1635 = vmatprep.subr.bf16.mxu0 0
    %1636 = vmatpush1.bf16.msra.mxu0 0
    %1637 = vmatprep.subr.bf16.mxu0 0
    %1638 = vmatpush1.bf16.msra.mxu0 0
    %1639 = vmatprep.subr.bf16.mxu0 0
    %1640 = vmatpush1.bf16.msra.mxu0 0
    %1641 = vmatprep.subr.bf16.mxu0 0
    %1642 = vmatpush1.bf16.msra.mxu0 0
    %1643 = vmatprep.subr.bf16.mxu0 0
    %1644 = vmatpush1.bf16.msra.mxu0 0
    %1645 = vmatprep.subr.bf16.mxu0 0
    %1646 = vmatpush1.bf16.msra.mxu0 0
    %1647 = vmatprep.subr.bf16.mxu0 0
    %1648 = vmatpush1.bf16.msra.mxu0 0
    %1649 = vmatprep.subr.bf16.mxu0 0
    %1650 = vmatpush1.bf16.msra.mxu0 0
    %1651 = vmatprep.subr.bf16.mxu0 0
    %1652 = vmatpush1.bf16.msra.mxu0 0
    %1653 = vmatprep.subr.bf16.mxu0 0
    %1654 = vmatpush1.bf16.msra.mxu0 0
    %1655 = vmatprep.subr.bf16.mxu0 0
    %1656 = vmatpush1.bf16.msra.mxu0 0
    %1657 = vmatprep.subr.bf16.mxu0 0
    %1658 = vmatpush1.bf16.msra.mxu0 0
    %1659 = vmatprep.subr.bf16.mxu0 0
    %1660 = vmatpush1.bf16.msra.mxu0 0
    %1661 = vmatprep.mubr.bf16.mxu0 0
    %1662 = vmatmul.mubr.bf16.gmra.mrb[0].mxu0 %v1623
    %v1663 = vpop.f32.mrb[0].mxu0
    %v1664 = vadd.f32 0.0, %v1663
    %v1665 = vpop.f32.mrb[0].mxu0
    %v1666 = vpop.f32.mrb[0].mxu0
    %v1667 = vadd.f32 0.0, %v1666
    %v1668 = vpop.f32.mrb[0].mxu0
    %1669 = vdwg.mxu0
    %1672 = vrot.lane.b32.xlu0 %v1079, 16
    %v1673 = vpop.permute.xlu0 %1672
    %1674 = vrot.lane.b32.xlu0 %v1082, 16
    %v1675 = vpop.permute.xlu0 %1674
    %1680 = vrot.lane.b32.xlu0 %v1605, 32
    %v1681 = vpop.permute.xlu0 %1680
    %1682 = vrot.lane.b32.xlu0 %v1608, 32
    %v1683 = vpop.permute.xlu0 %1682
    %1688 = vrot.lane.b32.xlu0 %v1664, 48
    %v1689 = vpop.permute.xlu0 %1688
    %1690 = vrot.lane.b32.xlu0 %v1667, 48
    %v1691 = vpop.permute.xlu0 %1690
    %vm1694 = vcmask 130048
    %v1695 = vsel %vm1694, %v553, %v1673
    %v1696 = vsel %vm1694, %v556, %v1675
    %vm1697 = vcmask 261120
    %v1698 = vsel %vm1697, %v1695, %v1681
    %v1699 = vsel %vm1697, %v1696, %v1683
    %vm1700 = vcmask 392192
    %v1701 = vsel %vm1700, %v1698, %v1689
    %v1702 = vsel %vm1700, %v1699, %v1691
    %v1703 = vld [vmem:[%s6] sm:$0x1]
    %v1705 = vlaneseq
    %v1706 = vshrl.u32 %v1705, 7
    %v1707 = vsub.s32 0, %v1706
    %v1708 = vrot.slane %v1703, %v1707
    %v1710 = vadd.f32 %v1701, %v1708
    %v1711 = vadd.f32 %v1702, %v1708
    %vm1712 = vcmp.gt.f32.partialorder %v1710, 0.0
    %vm1713 = vcmp.gt.f32.partialorder %v1711, 0.0
    %v1714 = vmul.f32 %v1710, 0.01
    %v1715 = vmul.f32 %v1711, 0.01
    %v1716 = vsel %vm1712, %v1710, %v1714
    %v1717 = vsel %vm1713, %v1711, %v1715
    %v1718 = vpack.c.bf16 %v1717, %v1716
    %v1719 = vld [vmem:[%s7] sm:$0xf]
    %v1720 = vld [vmem:[%s7 + $0x4] sm:$0xf]
    %v1721 = vld [vmem:[%s7 + $0x8] sm:$0xf]
    %v1722 = vld [vmem:[%s7 + $0xc] sm:$0xf]
    %v1723 = vld [vmem:[%s7 + $0x10] sm:$0xf]
    %v1724 = vld [vmem:[%s7 + $0x14] sm:$0xf]
    %v1725 = vld [vmem:[%s7 + $0x18] sm:$0xf]
    %v1726 = vld [vmem:[%s7 + $0x1c] sm:$0xf]
    %v1727 = vld [vmem:[%s8] sm:$0x1]
    %v1729 = vlaneseq
    %v1730 = vshrl.u32 %v1729, 7
    %v1731 = vsub.s32 0, %v1730
    %v1732 = vrot.slane %v1727, %v1731
    %v1742 = vunpack.c.l.b16 %v1719
    %v1743 = vunpack.c.l.b16 %v1720
    %v1744 = vunpack.c.l.b16 %v1721
    %v1745 = vunpack.c.l.b16 %v1722
    %v1746 = vunpack.c.l.b16 %v1723
    %v1747 = vunpack.c.l.b16 %v1724
    %v1748 = vunpack.c.l.b16 %v1725
    %v1749 = vunpack.c.l.b16 %v1726
    %v1750 = vpack.c.b16 %v1743, %v1742
    %v1751 = vpack.c.b16 %v1745, %v1744
    %v1752 = vpack.c.b16 %v1747, %v1746
    %v1753 = vpack.c.b16 %v1749, %v1748
    %vm1758 = vcmask 523264
    %v1760 = vsel %vm1758, %v1718, 0
    %1762 = vmatprep.subr.bf16.mxu0 0
    %1763 = vmatpush1.bf16.msra.mxu0 %v1750
    %1764 = vmatprep.subr.bf16.mxu0 0
    %1765 = vmatpush1.bf16.msra.mxu0 %v1751
    %1766 = vmatprep.subr.bf16.mxu0 0
    %1767 = vmatpush1.bf16.msra.mxu0 %v1752
    %1768 = vmatprep.subr.bf16.mxu0 0
    %1769 = vmatpush1.bf16.msra.mxu0 %v1753
    %1770 = vmatprep.subr.bf16.mxu0 0
    %1771 = vmatpush1.bf16.msra.mxu0 0
    %1772 = vmatprep.subr.bf16.mxu0 0
    %1773 = vmatpush1.bf16.msra.mxu0 0
    %1774 = vmatprep.subr.bf16.mxu0 0
    %1775 = vmatpush1.bf16.msra.mxu0 0
    %1776 = vmatprep.subr.bf16.mxu0 0
    %1777 = vmatpush1.bf16.msra.mxu0 0
    %1778 = vmatprep.subr.bf16.mxu0 0
    %1779 = vmatpush1.bf16.msra.mxu0 0
    %1780 = vmatprep.subr.bf16.mxu0 0
    %1781 = vmatpush1.bf16.msra.mxu0 0
    %1782 = vmatprep.subr.bf16.mxu0 0
    %1783 = vmatpush1.bf16.msra.mxu0 0
    %1784 = vmatprep.subr.bf16.mxu0 0
    %1785 = vmatpush1.bf16.msra.mxu0 0
    %1786 = vmatprep.subr.bf16.mxu0 0
    %1787 = vmatpush1.bf16.msra.mxu0 0
    %1788 = vmatprep.subr.bf16.mxu0 0
    %1789 = vmatpush1.bf16.msra.mxu0 0
    %1790 = vmatprep.subr.bf16.mxu0 0
    %1791 = vmatpush1.bf16.msra.mxu0 0
    %1792 = vmatprep.subr.bf16.mxu0 0
    %1793 = vmatpush1.bf16.msra.mxu0 0
    %1794 = vmatprep.mubr.bf16.mxu0 0
    %1795 = vmatmul.mubr.bf16.gmra.mrb[0].mxu0 %v1760
    %v1796 = vpop.f32.mrb[0].mxu0
    %v1797 = vadd.f32 %v1732, %v1796
    %v1798 = vpop.f32.mrb[0].mxu0
    %v1799 = vpop.f32.mrb[0].mxu0
    %v1800 = vadd.f32 %v1732, %v1799
    %v1801 = vpop.f32.mrb[0].mxu0
    %1802 = vdwg.mxu0
    %vm1803 = vcmp.gt.f32.partialorder %v1797, 0.0
    %vm1804 = vcmp.gt.f32.partialorder %v1800, 0.0
    %v1805 = vmul.f32 %v1797, 0.01
    %v1806 = vmul.f32 %v1800, 0.01
    %v1807 = vsel %vm1803, %v1797, %v1805
    %v1808 = vsel %vm1804, %v1800, %v1806
    %1811 = vrot.lane.b32.xlu0 %v1807, 64
    %v1812 = vpop.permute.xlu0 %1811
    %1813 = vrot.lane.b32.xlu0 %v1808, 64
    %v1814 = vpop.permute.xlu0 %1813
    %v1817 = vsel %vm1758, %v1716, %v1812
    %v1818 = vsel %vm1758, %v1717, %v1814
    %1819 = vst [vmem:[#allocation2] sm:$0xff] %v1817
    %1820 = vst [vmem:[#allocation2 + $0x8] sm:$0xff] %v1818
    // Predicated region
    $region38: #{tpu_custom_call.1} parent=1 // pred_check
      _
    $region39: #{tpu_custom_call.1} parent=1 // pred_check_branch
      %1822 = sbr.rel (0) target = $region41
    $region40: #{tpu_custom_call.1} parent=1 // pred_region
      %s1824 = ssub.s32 256, 256
      %1825 = vsyncadd [#allocation3], %s1824
      %s1826 = sshll.u32 [#allocation2], 4
      %s1827 = int_to_ptr.vmem [resolvable:$true] %s1826
      %1832 = dma.vmem_to_hbm [thread:$0]  %s1827, 256, %s9, [#allocation3], 128, 128, 8
    $region41: #{tpu_custom_call.1} parent=1 // pred_fallthru
      _
    // Predicated region
    $region42: #{tpu_custom_call.1} parent=1 // pred_check
      _
    $region43: #{tpu_custom_call.1} parent=1 // pred_check_branch
      %1834 = sbr.rel (0) target = $region45
    $region44: #{tpu_custom_call.1} parent=1 // pred_region
      %1835 = dma.done [#allocation3], 256
    $region45: #{tpu_custom_call.1} parent=1 // pred_fallthru
      _
    %1836 = vsyncpa [#allocation3], 1

</llo_original>
